<compile_context>
chip_gen: v6e
topology: v6e:2x2x1
jax: 0.10.0
libtpu: 0.0.40
codegen_flags: <defaults>
</compile_context>

<pallas_src>
import math

import jax
import jax.numpy as jnp
from jax.experimental import pallas as pl
from jax.experimental.pallas import tpu as pltpu

BN_EPS = 1e-5
LEAKY_SLOPE = 0.01            # PyTorch LeakyReLU default
TARGET_TILE_M = 4096          # lane-axis tile; footprint is tiny (K<=~100, F<=~128)


def _default_vmem_limit():
    """~3/4 of physical VMEM, capped at 100 MiB (48 MiB on v7x, 96 MiB on v5e/v6e)."""
    try:
        cap = int(pltpu.get_tpu_info().vmem_capacity_bytes)
    except Exception:
        cap = 128 * 1024 * 1024
    return int(min(cap * 3 // 4, 100 * 1024 * 1024))


VMEM_LIMIT = _default_vmem_limit()


def _round_up(x, q):
    return ((x + q - 1) // q) * q


def _pick_tile(m, target=TARGET_TILE_M):
    """Largest lane-friendly tile: a multiple of 128 dividing m, <= target."""
    if m <= target:
        return m                       # block == full dim is always legal
    for t in range(target, 127, -128):
        if m % t == 0:
            return t
    # TODO(synk): ragged m (no 128-multiple divisor) falls back to one full
    # block; pad m in the wrapper if this matters for awkward shapes.
    return m


# ----------------------------------------------------------------------------
# Pallas kernels
# ----------------------------------------------------------------------------
def conv_stats_kernel(p_ref, psum_ref, gram_ref):
    """Accumulate patch-side moments over M tiles (P3 accumulator pattern).

    psum_ref : (Kp, 1)  f32   sum over columns of P
    gram_ref : (Kp, Kp) f32   P @ P^T
    Grid is (split, n_tiles // split); axis 0 is 'parallel' (v7x TC split),
    axis 1 is the 'arbitrary' reduction axis.
    """
    j = pl.program_id(1)

    @pl.when(j == 0)
    def _():
        psum_ref[...] = jnp.zeros_like(psum_ref)
        gram_ref[...] = jnp.zeros_like(gram_ref)

    p = p_ref[...]                                           # (Kp, tile_m) bf16
    psum_ref[...] += jnp.sum(p.astype(jnp.float32), axis=1, keepdims=True)
    # Gram: contract over the big M axis of both operands (A @ A^T) on the MXU.
    gram_ref[...] += jax.lax.dot_general(
        p, p, (((1,), (1,)), ((), ())), preferred_element_type=jnp.float32)


def conv_bn_act_kernel(p_ref, w_ref, scale_ref, shift_ref, o_ref):
    """Fused conv-matmul + BatchNorm affine + LeakyReLU, bf16 on store only."""
    y = jnp.dot(w_ref[...], p_ref[...], preferred_element_type=jnp.float32)
    z = y * scale_ref[...] + shift_ref[...]                  # f32 VPU math (v5e-safe)
    o_ref[...] = jnp.where(z >= 0, z, LEAKY_SLOPE * z).astype(o_ref.dtype)


def heads_kernel(h_ref, w_ref, b_ref, o_ref):
    """Fused dual Linear heads, channel-major: (2L, tile_n) = W2 @ h + b."""
    o_ref[...] = (
        jnp.dot(w_ref[...], h_ref[...], preferred_element_type=jnp.float32)
        + b_ref[...]
    )


# ----------------------------------------------------------------------------
# pallas_call wrappers
# ----------------------------------------------------------------------------
def conv_stats(patches_bf16, w_f32, gamma, beta, m_total):
    """Stats pass -> fused training-mode BN (scale, shift), each (F, 1) f32."""
    Kp, M = patches_bf16.shape
    tile_m = _pick_tile(M)
    n_tiles = M // tile_m
    split = 2 if (n_tiles >= 2 and n_tiles % 2 == 0) else 1   # v7x: 2 TCs
    nj = n_tiles // split

    def p_index(c, j):
        return (0, c * nj + j)

    psum_parts, gram_parts = pl.pallas_call(
        conv_stats_kernel,
        out_shape=(
            jax.ShapeDtypeStruct((split, Kp, 1), jnp.float32),
            jax.ShapeDtypeStruct((split, Kp, Kp), jnp.float32),
        ),
        grid_spec=pltpu.PrefetchScalarGridSpec(
            num_scalar_prefetch=0,
            grid=(split, nj),
            in_specs=[pl.BlockSpec((Kp, tile_m), p_index)],
            out_specs=(
                pl.BlockSpec((None, Kp, 1), lambda c, j: (c, 0, 0)),
                pl.BlockSpec((None, Kp, Kp), lambda c, j: (c, 0, 0)),
            ),
        ),
        compiler_params=pltpu.CompilerParams(
            dimension_semantics=("parallel", "arbitrary"),
            vmem_limit_bytes=VMEM_LIMIT,
        ),
    )(patches_bf16)

    # Tiny f32 glue (F- and K-sized): combine per-core partials and derive the
    # fused BN scale/shift.  Zero-padded K rows/cols contribute nothing.
    psum = jnp.sum(psum_parts, axis=0)                       # (Kp, 1)
    gram = jnp.sum(gram_parts, axis=0)                       # (Kp, Kp)
    inv_m = 1.0 / float(m_total)
    sum_y = w_f32 @ psum                                     # (F, 1)
    sumsq_y = jnp.sum((w_f32 @ gram) * w_f32, axis=1, keepdims=True)
    mean = sum_y * inv_m
    var = sumsq_y * inv_m - mean * mean                      # biased (training BN)
    inv_std = jax.lax.rsqrt(var + BN_EPS)
    scale = gamma * inv_std
    shift = beta - scale * mean
    return scale, shift


def conv_bn_act(patches_bf16, w_fk, scale, shift):
    """Fused conv + BN affine + LeakyReLU; bf16 (F, M) output, 'parallel' grid."""
    Kp, M = patches_bf16.shape
    F = w_fk.shape[0]
    tile_m = _pick_tile(M)
    return pl.pallas_call(
        conv_bn_act_kernel,
        out_shape=jax.ShapeDtypeStruct((F, M), jnp.bfloat16),
        grid_spec=pltpu.PrefetchScalarGridSpec(
            num_scalar_prefetch=0,
            grid=(M // tile_m,),
            in_specs=[
                pl.BlockSpec((Kp, tile_m), lambda i: (0, i)),
                pl.BlockSpec((F, Kp), lambda i: (0, 0)),
                pl.BlockSpec((F, 1), lambda i: (0, 0)),
                pl.BlockSpec((F, 1), lambda i: (0, 0)),
            ],
            out_specs=pl.BlockSpec((F, tile_m), lambda i: (0, i)),
        ),
        compiler_params=pltpu.CompilerParams(
            dimension_semantics=("parallel",),               # megacore-shardable
            vmem_limit_bytes=VMEM_LIMIT,
        ),
    )(patches_bf16, w_fk, scale, shift)


def linear_heads(h_cm_bf16, w2_bf16, b2):
    """Channel-major dual heads: (2L, N) = W2 @ h_cm + b2, gridded over N."""
    D, N = h_cm_bf16.shape
    L2 = w2_bf16.shape[0]
    tile_n = _pick_tile(N)
    return pl.pallas_call(
        heads_kernel,
        out_shape=jax.ShapeDtypeStruct((L2, N), jnp.float32),
        grid_spec=pltpu.PrefetchScalarGridSpec(
            num_scalar_prefetch=0,
            grid=(N // tile_n,),
            in_specs=[
                pl.BlockSpec((D, tile_n), lambda i: (0, i)),
                pl.BlockSpec((L2, D), lambda i: (0, 0)),
                pl.BlockSpec((L2, 1), lambda i: (0, 0)),
            ],
            out_specs=pl.BlockSpec((L2, tile_n), lambda i: (0, i)),
        ),
        compiler_params=pltpu.CompilerParams(
            dimension_semantics=("parallel",),
            vmem_limit_bytes=VMEM_LIMIT,
        ),
    )(h_cm_bf16, w2_bf16, b2)


# ----------------------------------------------------------------------------
# Glue: channel-major im2col (K ordered (c, kh, kw) to match PyTorch weight
# flattening; M ordered (n, oh, ow)), with K zero-padded to a multiple of 16.
# ----------------------------------------------------------------------------
def im2col_cm(x_cnhw, k, s, p, k_pad):
    C, N, H, W = x_cnhw.shape
    xp = jnp.pad(x_cnhw, ((0, 0), (0, 0), (p, p), (p, p)))
    OH = (H + 2 * p - k) // s + 1
    OW = (W + 2 * p - k) // s + 1
    taps = [
        xp[:, :, kh: kh + s * OH: s, kw: kw + s * OW: s]
        for kh in range(k)
        for kw in range(k)
    ]
    pt = jnp.stack(taps, axis=1).reshape(C * k * k, N * OH * OW)   # (K, M)
    K = C * k * k
    if k_pad > K:
        pt = jnp.pad(pt, ((0, k_pad - K), (0, 0)))
    return pt, OH, OW


# ----------------------------------------------------------------------------
# Parameter init (mirrors param_init: xavier_normal weights, zero biases,
# BN weight ~ N(1, 0.02), BN bias 0).  Conv bias omitted (cancels under BN).
# ----------------------------------------------------------------------------
def xavier_normal(key, shape, fan_in, fan_out):
    std = math.sqrt(2.0 / (fan_in + fan_out))
    return std * jax.random.normal(key, shape, dtype=jnp.float32)


def init_encoder_params(key, in_channels, filters, kernel_sizes, flat_dim, latent_dim):
    params = {"conv": []}
    ref = {"conv": []}            # f32 (bf16-rounded) copies for the reference check
    c_prev = in_channels
    for f, k in zip(filters, kernel_sizes):
        key, kw_, kg_ = jax.random.split(key, 3)
        fan_in = c_prev * k * k
        fan_out = f * k * k
        w = xavier_normal(kw_, (f, c_prev, k, k), fan_in, fan_out)   # PyTorch OIHW
        K = c_prev * k * k
        kp = _round_up(K, 16)                                        # bf16 sublane packing
        w_fk = jnp.pad(w.reshape(f, K), ((0, 0), (0, kp - K))).astype(jnp.bfloat16)
        gamma = 1.0 + 0.02 * jax.random.normal(kg_, (f, 1), dtype=jnp.float32)
        beta = jnp.zeros((f, 1), jnp.float32)
        params["conv"].append((w_fk, gamma, beta))
        ref["conv"].append(
            (w_fk[:, :K].astype(jnp.float32).reshape(f, c_prev, k, k), gamma, beta))
        c_prev = f
    key, km_, kl_ = jax.random.split(key, 3)
    wm = xavier_normal(km_, (latent_dim, flat_dim), flat_dim, latent_dim)
    wl = xavier_normal(kl_, (latent_dim, flat_dim), flat_dim, latent_dim)
    w2 = jnp.concatenate([wm, wl], axis=0).astype(jnp.bfloat16)      # (2L, flat_dim)
    b2 = jnp.zeros((2 * latent_dim, 1), jnp.float32)
    params["heads"] = (w2, b2)
    ref["heads"] = w2.astype(jnp.float32)
    return params, ref


# ----------------------------------------------------------------------------
# Encoder forward (Pallas path)
# ----------------------------------------------------------------------------
def encoder_forward(params, x_nchw, kernel_sizes, strides, paddings,
                    flat_dim, latent_dim):
    N = x_nchw.shape[0]
    # channel-major (C, N, H, W); bf16 activations end-to-end (perf review).
    h = jnp.transpose(x_nchw, (1, 0, 2, 3)).astype(jnp.bfloat16)
    for (w_fk, gamma, beta), k, s, p in zip(
        params["conv"], kernel_sizes, strides, paddings
    ):
        F, kp = w_fk.shape
        patches, OH, OW = im2col_cm(h, k, s, p, kp)          # (Kp, M) bf16
        M = patches.shape[1]
        scale, shift = conv_stats(
            patches, w_fk.astype(jnp.float32), gamma, beta, M)
        a = conv_bn_act(patches, w_fk, scale, shift)         # (F, M) bf16
        h = a.reshape(F, N, OH, OW)                          # stay channel-major
    # (c, oh, ow)-major flatten == PyTorch NCHW .reshape(-1, flat_dim), columns = n
    h_cm = jnp.transpose(h, (0, 2, 3, 1)).reshape(flat_dim, N)
    zz = linear_heads(h_cm, *params["heads"])                # (2L, N) f32
    zz = zz.T
    return zz[:, :latent_dim], zz[:, latent_dim:]


# ----------------------------------------------------------------------------
# Pure-JAX reference (training-mode BN, bf16-rounded params) for tolerance check
# ----------------------------------------------------------------------------
def encoder_reference(ref_params, x_nchw, strides, paddings, flat_dim, latent_dim):
    h = x_nchw.astype(jnp.bfloat16).astype(jnp.float32)
    for (w_oihw, gamma, beta), s, p in zip(ref_params["conv"], strides, paddings):
        y = jax.lax.conv_general_dilated(
            h, w_oihw, window_strides=(s, s), padding=[(p, p), (p, p)],
            dimension_numbers=("NCHW", "OIHW", "NCHW"))
        mean = jnp.mean(y, axis=(0, 2, 3), keepdims=True)
        var = jnp.var(y, axis=(0, 2, 3), keepdims=True)
        z = (gamma.reshape(1, -1, 1, 1) * (y - mean) * jax.lax.rsqrt(var + BN_EPS)
             + beta.reshape(1, -1, 1, 1))
        h = jnp.where(z >= 0, z, LEAKY_SLOPE * z)
    hf = h.reshape(h.shape[0], flat_dim)
    zz = hf @ ref_params["heads"].T
    return zz[:, :latent_dim], zz[:, latent_dim:]


if __name__ == "__main__":
    # Small config consistent with the module:
    #   in_channels=4, in_dim=16, filters=[8,16], k=[3,3], s=[2,2], p=[1,1]
    #   spatial 16 -> 8 -> 4, flat_dim = 16*4*4 = 256, latent_dim = 8, batch = 2
    in_channels, in_dim, latent_dim = 4, 16, 8
    filters = [8, 16]
    kernel_sizes = [3, 3]
    strides = [2, 2]
    paddings = [1, 1]
    flat_dim = filters[-1] * 4 * 4
    batch = 2

    key = jax.random.PRNGKey(0)
    key_x, key_p = jax.random.split(key)
    x = jax.random.normal(key_x, (batch, in_channels, in_dim, in_dim), jnp.float32)
    params, ref_params = init_encoder_params(
        key_p, in_channels, filters, kernel_sizes, flat_dim, latent_dim)

    fwd = jax.jit(
        lambda prm, xx: encoder_forward(
            prm, xx, kernel_sizes, strides, paddings, flat_dim, latent_dim))
    z_mean, z_logvar = fwd(params, x)
    jax.block_until_ready((z_mean, z_logvar))

    assert z_mean.shape == (batch, latent_dim)
    assert z_logvar.shape == (batch, latent_dim)
    assert bool(jnp.isfinite(z_mean).all()) and bool(jnp.isfinite(z_logvar).all())

    # Loose tolerance vs an f32 reference with bf16-rounded params (the kernel
    # additionally keeps inter-layer activations in bf16).
    zm_ref, zl_ref = encoder_reference(
        ref_params, x, strides, paddings, flat_dim, latent_dim)
    err = max(float(jnp.max(jnp.abs(z_mean - zm_ref))),
              float(jnp.max(jnp.abs(z_logvar - zl_ref))))
    assert err < 0.15, f"mismatch vs reference: max abs err {err}"

    print("KERNEL_OK")
</pallas_src>

<mosaic_0001>
module attributes {stable_mosaic.version = 11 : i64} {
  func.func @conv_stats_kernel(%arg0: i32, %arg1: i32, %arg2: memref<48x128xbf16, #tpu.memory_space<vmem>>, %arg3: memref<1x48x1xf32, #tpu.memory_space<vmem>>, %arg4: memref<1x48x48xf32, #tpu.memory_space<vmem>>) attributes {dimension_semantics = [#tpu.dimension_semantics<parallel>, #tpu.dimension_semantics<arbitrary>], iteration_bounds = array<i64: 1, 1>, scalar_prefetch = 0 : i64, scratch_operands = 0 : i64, tpu.core_type = #tpu.core_type<tc>, window_params = [{transform_indices = @transform_0, window_bounds = array<i64: 48, 128>}, {transform_indices = @transform_1, window_bounds = array<i64: 1, 48, 1>}, {transform_indices = @transform_2, window_bounds = array<i64: 1, 48, 48>}]} {
    %c0_i32 = arith.constant 0 : i32
    %0 = arith.cmpi eq, %arg1, %c0_i32 : i32
    %1 = arith.extui %0 : i1 to i32
    %c0_i32_0 = arith.constant 0 : i32
    %2 = arith.cmpi ne, %1, %c0_i32_0 : i32
    scf.if %2 {
      %cst_15 = arith.constant 0.000000e+00 : f32
      %20 = vector.broadcast %cst_15 : f32 to vector<48x1xf32>
      %c0_16 = arith.constant 0 : index
      %c0_17 = arith.constant 0 : index
      %c0_18 = arith.constant 0 : index
      %21 = vector.load %arg3[%c0_16, %c0_17, %c0_18] : memref<1x48x1xf32, #tpu.memory_space<vmem>>, vector<1x48x1xf32>
      %22 = vector.shape_cast %21 : vector<1x48x1xf32> to vector<48x1xf32>
      %23 = vector.shape_cast %20 : vector<48x1xf32> to vector<1x48x1xf32>
      tpu.vector_store %arg3[%c0_16, %c0_17, %c0_18], %23 {strides = array<i32>} : memref<1x48x1xf32, #tpu.memory_space<vmem>>, vector<1x48x1xf32>,
      %cst_19 = arith.constant 0.000000e+00 : f32
      %24 = vector.broadcast %cst_19 : f32 to vector<48x48xf32>
      %c0_20 = arith.constant 0 : index
      %c0_21 = arith.constant 0 : index
      %c0_22 = arith.constant 0 : index
      %25 = vector.load %arg4[%c0_20, %c0_21, %c0_22] : memref<1x48x48xf32, #tpu.memory_space<vmem>>, vector<1x48x48xf32>
      %26 = vector.shape_cast %25 : vector<1x48x48xf32> to vector<48x48xf32>
      %27 = vector.shape_cast %24 : vector<48x48xf32> to vector<1x48x48xf32>
      tpu.vector_store %arg4[%c0_20, %c0_21, %c0_22], %27 {strides = array<i32>} : memref<1x48x48xf32, #tpu.memory_space<vmem>>, vector<1x48x48xf32>,
    } else {
    }
    %c0 = arith.constant 0 : index
    %c0_1 = arith.constant 0 : index
    %3 = vector.load %arg2[%c0, %c0_1] : memref<48x128xbf16, #tpu.memory_space<vmem>>, vector<48x128xbf16>
    %c0_2 = arith.constant 0 : index
    %c0_3 = arith.constant 0 : index
    %c0_4 = arith.constant 0 : index
    %4 = vector.load %arg3[%c0_2, %c0_3, %c0_4] : memref<1x48x1xf32, #tpu.memory_space<vmem>>, vector<1x48x1xf32>
    %5 = vector.shape_cast %4 : vector<1x48x1xf32> to vector<48x1xf32>
    %6 = arith.extf %3 : vector<48x128xbf16> to vector<48x128xf32>
    %cst = arith.constant dense<0.000000e+00> : vector<48xf32>
    %7 = vector.multi_reduction <add>, %6, %cst [1] : vector<48x128xf32> to vector<48xf32>
    %8 = vector.shape_cast %7 : vector<48xf32> to vector<48x1xf32>
    %9 = arith.addf %5, %8 : vector<48x1xf32>
    %c0_5 = arith.constant 0 : index
    %c0_6 = arith.constant 0 : index
    %c0_7 = arith.constant 0 : index
    %10 = vector.load %arg3[%c0_5, %c0_6, %c0_7] : memref<1x48x1xf32, #tpu.memory_space<vmem>>, vector<1x48x1xf32>
    %11 = vector.shape_cast %10 : vector<1x48x1xf32> to vector<48x1xf32>
    %12 = vector.shape_cast %9 : vector<48x1xf32> to vector<1x48x1xf32>
    tpu.vector_store %arg3[%c0_5, %c0_6, %c0_7], %12 {strides = array<i32>} : memref<1x48x1xf32, #tpu.memory_space<vmem>>, vector<1x48x1xf32>,
    %c0_8 = arith.constant 0 : index
    %c0_9 = arith.constant 0 : index
    %c0_10 = arith.constant 0 : index
    %13 = vector.load %arg4[%c0_8, %c0_9, %c0_10] : memref<1x48x48xf32, #tpu.memory_space<vmem>>, vector<1x48x48xf32>
    %14 = vector.shape_cast %13 : vector<1x48x48xf32> to vector<48x48xf32>
    %cst_11 = arith.constant dense<0.000000e+00> : vector<48x48xf32>
    %15 = tpu.matmul %3, %3, %cst_11 {dimension_numbers = #tpu.dot_dimension_numbers<[1], [1], [0], [0], [0, 0, 1, 0], [], []>} : vector<48x128xbf16>, vector<48x128xbf16>, vector<48x48xf32> -> vector<48x48xf32>
    %16 = arith.addf %14, %15 : vector<48x48xf32>
    %c0_12 = arith.constant 0 : index
    %c0_13 = arith.constant 0 : index
    %c0_14 = arith.constant 0 : index
    %17 = vector.load %arg4[%c0_12, %c0_13, %c0_14] : memref<1x48x48xf32, #tpu.memory_space<vmem>>, vector<1x48x48xf32>
    %18 = vector.shape_cast %17 : vector<1x48x48xf32> to vector<48x48xf32>
    %19 = vector.shape_cast %16 : vector<48x48xf32> to vector<1x48x48xf32>
    tpu.vector_store %arg4[%c0_12, %c0_13, %c0_14], %19 {strides = array<i32>} : memref<1x48x48xf32, #tpu.memory_space<vmem>>, vector<1x48x48xf32>,
    return
  }
  func.func @transform_0(%arg0: i32, %arg1: i32) -> (i32, i32) {
    %c1_i32 = arith.constant 1 : i32
    %0 = arith.muli %arg0, %c1_i32 : i32
    %1 = arith.addi %0, %arg1 : i32
    %c0_i32 = arith.constant 0 : i32
    %c0_i32_0 = arith.constant 0 : i32
    return %c0_i32, %1 : i32, i32
  }
  func.func @transform_1(%arg0: i32, %arg1: i32) -> (i32, i32, i32) {
    %c0_i32 = arith.constant 0 : i32
    %c0_i32_0 = arith.constant 0 : i32
    %c0_i32_1 = arith.constant 0 : i32
    return %arg0, %c0_i32, %c0_i32_0 : i32, i32, i32
  }
  func.func @transform_2(%arg0: i32, %arg1: i32) -> (i32, i32, i32) {
    %c0_i32 = arith.constant 0 : i32
    %c0_i32_0 = arith.constant 0 : i32
    %c0_i32_1 = arith.constant 0 : i32
    return %arg0, %c0_i32, %c0_i32_0 : i32, i32, i32
  }
}

module attributes {stable_mosaic.version = 11 : i64} {
  func.func @conv_bn_act_kernel(%arg0: i32, %arg1: memref<48x128xbf16, #tpu.memory_space<vmem>>, %arg2: memref<8x48xbf16, #tpu.memory_space<vmem>>, %arg3: memref<8x1xf32, #tpu.memory_space<vmem>>, %arg4: memref<8x1xf32, #tpu.memory_space<vmem>>, %arg5: memref<8x128xbf16, #tpu.memory_space<vmem>>) attributes {dimension_semantics = [#tpu.dimension_semantics<parallel>], iteration_bounds = array<i64: 1>, scalar_prefetch = 0 : i64, scratch_operands = 0 : i64, tpu.core_type = #tpu.core_type<tc>, window_params = [{transform_indices = @transform_0, window_bounds = array<i64: 48, 128>}, {pipeline_mode = #tpu.pipeline_mode<synchronous>, transform_indices = @transform_1, window_bounds = array<i64: 8, 48>}, {pipeline_mode = #tpu.pipeline_mode<synchronous>, transform_indices = @transform_2, window_bounds = array<i64: 8, 1>}, {pipeline_mode = #tpu.pipeline_mode<synchronous>, transform_indices = @transform_3, window_bounds = array<i64: 8, 1>}, {transform_indices = @transform_4, window_bounds = array<i64: 8, 128>}]} {
    %c0 = arith.constant 0 : index
    %c0_0 = arith.constant 0 : index
    %0 = vector.load %arg2[%c0, %c0_0] : memref<8x48xbf16, #tpu.memory_space<vmem>>, vector<8x48xbf16>
    %c0_1 = arith.constant 0 : index
    %c0_2 = arith.constant 0 : index
    %1 = vector.load %arg1[%c0_1, %c0_2] : memref<48x128xbf16, #tpu.memory_space<vmem>>, vector<48x128xbf16>
    %cst = arith.constant dense<0.000000e+00> : vector<8x128xf32>
    %2 = tpu.matmul %0, %1, %cst {dimension_numbers = #tpu.dot_dimension_numbers<[1], [0], [0], [1], [0, 0, 1, 1], [], []>} : vector<8x48xbf16>, vector<48x128xbf16>, vector<8x128xf32> -> vector<8x128xf32>
    %c0_3 = arith.constant 0 : index
    %c0_4 = arith.constant 0 : index
    %3 = vector.load %arg3[%c0_3, %c0_4] : memref<8x1xf32, #tpu.memory_space<vmem>>, vector<8x1xf32>
    %4 = vector.broadcast %3 : vector<8x1xf32> to vector<8x128xf32>
    %5 = arith.mulf %2, %4 : vector<8x128xf32>
    %c0_5 = arith.constant 0 : index
    %c0_6 = arith.constant 0 : index
    %6 = vector.load %arg4[%c0_5, %c0_6] : memref<8x1xf32, #tpu.memory_space<vmem>>, vector<8x1xf32>
    %7 = vector.broadcast %6 : vector<8x1xf32> to vector<8x128xf32>
    %8 = arith.addf %5, %7 : vector<8x128xf32>
    %cst_7 = arith.constant 0.000000e+00 : f32
    %9 = vector.broadcast %cst_7 : f32 to vector<8x128xf32>
    %10 = arith.cmpf oge, %8, %9 : vector<8x128xf32>
    %cst_8 = arith.constant 0.00999999977 : f32
    %11 = vector.broadcast %cst_8 : f32 to vector<8x128xf32>
    %12 = arith.mulf %11, %8 : vector<8x128xf32>
    %13 = arith.select %10, %8, %12 : vector<8x128xi1>, vector<8x128xf32>
    %14 = arith.truncf %13 : vector<8x128xf32> to vector<8x128xbf16>
    %c0_9 = arith.constant 0 : index
    %c0_10 = arith.constant 0 : index
    %15 = vector.load %arg5[%c0_9, %c0_10] : memref<8x128xbf16, #tpu.memory_space<vmem>>, vector<8x128xbf16>
    tpu.vector_store %arg5[%c0_9, %c0_10], %14 {strides = array<i32>} : memref<8x128xbf16, #tpu.memory_space<vmem>>, vector<8x128xbf16>,
    return
  }
  func.func @transform_0(%arg0: i32) -> (i32, i32) {
    %c0_i32 = arith.constant 0 : i32
    %c0_i32_0 = arith.constant 0 : i32
    return %c0_i32, %arg0 : i32, i32
  }
  func.func @transform_1(%arg0: i32) -> (i32, i32) {
    %c0_i32 = arith.constant 0 : i32
    %c0_i32_0 = arith.constant 0 : i32
    %c0_i32_1 = arith.constant 0 : i32
    return %c0_i32, %c0_i32_0 : i32, i32
  }
  func.func @transform_2(%arg0: i32) -> (i32, i32) {
    %c0_i32 = arith.constant 0 : i32
    %c0_i32_0 = arith.constant 0 : i32
    %c0_i32_1 = arith.constant 0 : i32
    return %c0_i32, %c0_i32_0 : i32, i32
  }
  func.func @transform_3(%arg0: i32) -> (i32, i32) {
    %c0_i32 = arith.constant 0 : i32
    %c0_i32_0 = arith.constant 0 : i32
    %c0_i32_1 = arith.constant 0 : i32
    return %c0_i32, %c0_i32_0 : i32, i32
  }
  func.func @transform_4(%arg0: i32) -> (i32, i32) {
    %c0_i32 = arith.constant 0 : i32
    %c0_i32_0 = arith.constant 0 : i32
    return %c0_i32, %arg0 : i32, i32
  }
}

module attributes {stable_mosaic.version = 11 : i64} {
  func.func @conv_stats_kernel(%arg0: i32, %arg1: i32, %arg2: memref<80x32xbf16, #tpu.memory_space<vmem>>, %arg3: memref<1x80x1xf32, #tpu.memory_space<vmem>>, %arg4: memref<1x80x80xf32, #tpu.memory_space<vmem>>) attributes {dimension_semantics = [#tpu.dimension_semantics<parallel>, #tpu.dimension_semantics<arbitrary>], iteration_bounds = array<i64: 1, 1>, scalar_prefetch = 0 : i64, scratch_operands = 0 : i64, tpu.core_type = #tpu.core_type<tc>, window_params = [{transform_indices = @transform_0, window_bounds = array<i64: 80, 32>}, {transform_indices = @transform_1, window_bounds = array<i64: 1, 80, 1>}, {transform_indices = @transform_2, window_bounds = array<i64: 1, 80, 80>}]} {
    %c0_i32 = arith.constant 0 : i32
    %0 = arith.cmpi eq, %arg1, %c0_i32 : i32
    %1 = arith.extui %0 : i1 to i32
    %c0_i32_0 = arith.constant 0 : i32
    %2 = arith.cmpi ne, %1, %c0_i32_0 : i32
    scf.if %2 {
      %cst_15 = arith.constant 0.000000e+00 : f32
      %20 = vector.broadcast %cst_15 : f32 to vector<80x1xf32>
      %c0_16 = arith.constant 0 : index
      %c0_17 = arith.constant 0 : index
      %c0_18 = arith.constant 0 : index
      %21 = vector.load %arg3[%c0_16, %c0_17, %c0_18] : memref<1x80x1xf32, #tpu.memory_space<vmem>>, vector<1x80x1xf32>
      %22 = vector.shape_cast %21 : vector<1x80x1xf32> to vector<80x1xf32>
      %23 = vector.shape_cast %20 : vector<80x1xf32> to vector<1x80x1xf32>
      tpu.vector_store %arg3[%c0_16, %c0_17, %c0_18], %23 {strides = array<i32>} : memref<1x80x1xf32, #tpu.memory_space<vmem>>, vector<1x80x1xf32>,
      %cst_19 = arith.constant 0.000000e+00 : f32
      %24 = vector.broadcast %cst_19 : f32 to vector<80x80xf32>
      %c0_20 = arith.constant 0 : index
      %c0_21 = arith.constant 0 : index
      %c0_22 = arith.constant 0 : index
      %25 = vector.load %arg4[%c0_20, %c0_21, %c0_22] : memref<1x80x80xf32, #tpu.memory_space<vmem>>, vector<1x80x80xf32>
      %26 = vector.shape_cast %25 : vector<1x80x80xf32> to vector<80x80xf32>
      %27 = vector.shape_cast %24 : vector<80x80xf32> to vector<1x80x80xf32>
      tpu.vector_store %arg4[%c0_20, %c0_21, %c0_22], %27 {strides = array<i32>} : memref<1x80x80xf32, #tpu.memory_space<vmem>>, vector<1x80x80xf32>,
    } else {
    }
    %c0 = arith.constant 0 : index
    %c0_1 = arith.constant 0 : index
    %3 = vector.load %arg2[%c0, %c0_1] : memref<80x32xbf16, #tpu.memory_space<vmem>>, vector<80x32xbf16>
    %c0_2 = arith.constant 0 : index
    %c0_3 = arith.constant 0 : index
    %c0_4 = arith.constant 0 : index
    %4 = vector.load %arg3[%c0_2, %c0_3, %c0_4] : memref<1x80x1xf32, #tpu.memory_space<vmem>>, vector<1x80x1xf32>
    %5 = vector.shape_cast %4 : vector<1x80x1xf32> to vector<80x1xf32>
    %6 = arith.extf %3 : vector<80x32xbf16> to vector<80x32xf32>
    %cst = arith.constant dense<0.000000e+00> : vector<80xf32>
    %7 = vector.multi_reduction <add>, %6, %cst [1] : vector<80x32xf32> to vector<80xf32>
    %8 = vector.shape_cast %7 : vector<80xf32> to vector<80x1xf32>
    %9 = arith.addf %5, %8 : vector<80x1xf32>
    %c0_5 = arith.constant 0 : index
    %c0_6 = arith.constant 0 : index
    %c0_7 = arith.constant 0 : index
    %10 = vector.load %arg3[%c0_5, %c0_6, %c0_7] : memref<1x80x1xf32, #tpu.memory_space<vmem>>, vector<1x80x1xf32>
    %11 = vector.shape_cast %10 : vector<1x80x1xf32> to vector<80x1xf32>
    %12 = vector.shape_cast %9 : vector<80x1xf32> to vector<1x80x1xf32>
    tpu.vector_store %arg3[%c0_5, %c0_6, %c0_7], %12 {strides = array<i32>} : memref<1x80x1xf32, #tpu.memory_space<vmem>>, vector<1x80x1xf32>,
    %c0_8 = arith.constant 0 : index
    %c0_9 = arith.constant 0 : index
    %c0_10 = arith.constant 0 : index
    %13 = vector.load %arg4[%c0_8, %c0_9, %c0_10] : memref<1x80x80xf32, #tpu.memory_space<vmem>>, vector<1x80x80xf32>
    %14 = vector.shape_cast %13 : vector<1x80x80xf32> to vector<80x80xf32>
    %cst_11 = arith.constant dense<0.000000e+00> : vector<80x80xf32>
    %15 = tpu.matmul %3, %3, %cst_11 {dimension_numbers = #tpu.dot_dimension_numbers<[1], [1], [0], [0], [0, 0, 1, 0], [], []>} : vector<80x32xbf16>, vector<80x32xbf16>, vector<80x80xf32> -> vector<80x80xf32>
    %16 = arith.addf %14, %15 : vector<80x80xf32>
    %c0_12 = arith.constant 0 : index
    %c0_13 = arith.constant 0 : index
    %c0_14 = arith.constant 0 : index
    %17 = vector.load %arg4[%c0_12, %c0_13, %c0_14] : memref<1x80x80xf32, #tpu.memory_space<vmem>>, vector<1x80x80xf32>
    %18 = vector.shape_cast %17 : vector<1x80x80xf32> to vector<80x80xf32>
    %19 = vector.shape_cast %16 : vector<80x80xf32> to vector<1x80x80xf32>
    tpu.vector_store %arg4[%c0_12, %c0_13, %c0_14], %19 {strides = array<i32>} : memref<1x80x80xf32, #tpu.memory_space<vmem>>, vector<1x80x80xf32>,
    return
  }
  func.func @transform_0(%arg0: i32, %arg1: i32) -> (i32, i32) {
    %c1_i32 = arith.constant 1 : i32
    %0 = arith.muli %arg0, %c1_i32 : i32
    %1 = arith.addi %0, %arg1 : i32
    %c0_i32 = arith.constant 0 : i32
    %c0_i32_0 = arith.constant 0 : i32
    return %c0_i32, %1 : i32, i32
  }
  func.func @transform_1(%arg0: i32, %arg1: i32) -> (i32, i32, i32) {
    %c0_i32 = arith.constant 0 : i32
    %c0_i32_0 = arith.constant 0 : i32
    %c0_i32_1 = arith.constant 0 : i32
    return %arg0, %c0_i32, %c0_i32_0 : i32, i32, i32
  }
  func.func @transform_2(%arg0: i32, %arg1: i32) -> (i32, i32, i32) {
    %c0_i32 = arith.constant 0 : i32
    %c0_i32_0 = arith.constant 0 : i32
    %c0_i32_1 = arith.constant 0 : i32
    return %arg0, %c0_i32, %c0_i32_0 : i32, i32, i32
  }
}

module attributes {stable_mosaic.version = 11 : i64} {
  func.func @conv_bn_act_kernel(%arg0: i32, %arg1: memref<80x32xbf16, #tpu.memory_space<vmem>>, %arg2: memref<16x80xbf16, #tpu.memory_space<vmem>>, %arg3: memref<16x1xf32, #tpu.memory_space<vmem>>, %arg4: memref<16x1xf32, #tpu.memory_space<vmem>>, %arg5: memref<16x32xbf16, #tpu.memory_space<vmem>>) attributes {dimension_semantics = [#tpu.dimension_semantics<parallel>], iteration_bounds = array<i64: 1>, scalar_prefetch = 0 : i64, scratch_operands = 0 : i64, tpu.core_type = #tpu.core_type<tc>, window_params = [{transform_indices = @transform_0, window_bounds = array<i64: 80, 32>}, {pipeline_mode = #tpu.pipeline_mode<synchronous>, transform_indices = @transform_1, window_bounds = array<i64: 16, 80>}, {pipeline_mode = #tpu.pipeline_mode<synchronous>, transform_indices = @transform_2, window_bounds = array<i64: 16, 1>}, {pipeline_mode = #tpu.pipeline_mode<synchronous>, transform_indices = @transform_3, window_bounds = array<i64: 16, 1>}, {transform_indices = @transform_4, window_bounds = array<i64: 16, 32>}]} {
    %c0 = arith.constant 0 : index
    %c0_0 = arith.constant 0 : index
    %0 = vector.load %arg2[%c0, %c0_0] : memref<16x80xbf16, #tpu.memory_space<vmem>>, vector<16x80xbf16>
    %c0_1 = arith.constant 0 : index
    %c0_2 = arith.constant 0 : index
    %1 = vector.load %arg1[%c0_1, %c0_2] : memref<80x32xbf16, #tpu.memory_space<vmem>>, vector<80x32xbf16>
    %cst = arith.constant dense<0.000000e+00> : vector<16x32xf32>
    %2 = tpu.matmul %0, %1, %cst {dimension_numbers = #tpu.dot_dimension_numbers<[1], [0], [0], [1], [0, 0, 1, 1], [], []>} : vector<16x80xbf16>, vector<80x32xbf16>, vector<16x32xf32> -> vector<16x32xf32>
    %c0_3 = arith.constant 0 : index
    %c0_4 = arith.constant 0 : index
    %3 = vector.load %arg3[%c0_3, %c0_4] : memref<16x1xf32, #tpu.memory_space<vmem>>, vector<16x1xf32>
    %4 = vector.broadcast %3 : vector<16x1xf32> to vector<16x32xf32>
    %5 = arith.mulf %2, %4 : vector<16x32xf32>
    %c0_5 = arith.constant 0 : index
    %c0_6 = arith.constant 0 : index
    %6 = vector.load %arg4[%c0_5, %c0_6] : memref<16x1xf32, #tpu.memory_space<vmem>>, vector<16x1xf32>
    %7 = vector.broadcast %6 : vector<16x1xf32> to vector<16x32xf32>
    %8 = arith.addf %5, %7 : vector<16x32xf32>
    %cst_7 = arith.constant 0.000000e+00 : f32
    %9 = vector.broadcast %cst_7 : f32 to vector<16x32xf32>
    %10 = arith.cmpf oge, %8, %9 : vector<16x32xf32>
    %cst_8 = arith.constant 0.00999999977 : f32
    %11 = vector.broadcast %cst_8 : f32 to vector<16x32xf32>
    %12 = arith.mulf %11, %8 : vector<16x32xf32>
    %13 = arith.select %10, %8, %12 : vector<16x32xi1>, vector<16x32xf32>
    %14 = arith.truncf %13 : vector<16x32xf32> to vector<16x32xbf16>
    %c0_9 = arith.constant 0 : index
    %c0_10 = arith.constant 0 : index
    %15 = vector.load %arg5[%c0_9, %c0_10] : memref<16x32xbf16, #tpu.memory_space<vmem>>, vector<16x32xbf16>
    tpu.vector_store %arg5[%c0_9, %c0_10], %14 {strides = array<i32>} : memref<16x32xbf16, #tpu.memory_space<vmem>>, vector<16x32xbf16>,
    return
  }
  func.func @transform_0(%arg0: i32) -> (i32, i32) {
    %c0_i32 = arith.constant 0 : i32
    %c0_i32_0 = arith.constant 0 : i32
    return %c0_i32, %arg0 : i32, i32
  }
  func.func @transform_1(%arg0: i32) -> (i32, i32) {
    %c0_i32 = arith.constant 0 : i32
    %c0_i32_0 = arith.constant 0 : i32
    %c0_i32_1 = arith.constant 0 : i32
    return %c0_i32, %c0_i32_0 : i32, i32
  }
  func.func @transform_2(%arg0: i32) -> (i32, i32) {
    %c0_i32 = arith.constant 0 : i32
    %c0_i32_0 = arith.constant 0 : i32
    %c0_i32_1 = arith.constant 0 : i32
    return %c0_i32, %c0_i32_0 : i32, i32
  }
  func.func @transform_3(%arg0: i32) -> (i32, i32) {
    %c0_i32 = arith.constant 0 : i32
    %c0_i32_0 = arith.constant 0 : i32
    %c0_i32_1 = arith.constant 0 : i32
    return %c0_i32, %c0_i32_0 : i32, i32
  }
  func.func @transform_4(%arg0: i32) -> (i32, i32) {
    %c0_i32 = arith.constant 0 : i32
    %c0_i32_0 = arith.constant 0 : i32
    return %c0_i32, %arg0 : i32, i32
  }
}

module attributes {stable_mosaic.version = 11 : i64} {
  func.func @heads_kernel(%arg0: i32, %arg1: memref<256x2xbf16, #tpu.memory_space<vmem>>, %arg2: memref<16x256xbf16, #tpu.memory_space<vmem>>, %arg3: memref<16x1xf32, #tpu.memory_space<vmem>>, %arg4: memref<16x2xf32, #tpu.memory_space<vmem>>) attributes {dimension_semantics = [#tpu.dimension_semantics<parallel>], iteration_bounds = array<i64: 1>, scalar_prefetch = 0 : i64, scratch_operands = 0 : i64, tpu.core_type = #tpu.core_type<tc>, window_params = [{transform_indices = @transform_0, window_bounds = array<i64: 256, 2>}, {pipeline_mode = #tpu.pipeline_mode<synchronous>, transform_indices = @transform_1, window_bounds = array<i64: 16, 256>}, {pipeline_mode = #tpu.pipeline_mode<synchronous>, transform_indices = @transform_2, window_bounds = array<i64: 16, 1>}, {transform_indices = @transform_3, window_bounds = array<i64: 16, 2>}]} {
    %c0 = arith.constant 0 : index
    %c0_0 = arith.constant 0 : index
    %0 = vector.load %arg2[%c0, %c0_0] : memref<16x256xbf16, #tpu.memory_space<vmem>>, vector<16x256xbf16>
    %c0_1 = arith.constant 0 : index
    %c0_2 = arith.constant 0 : index
    %1 = vector.load %arg1[%c0_1, %c0_2] : memref<256x2xbf16, #tpu.memory_space<vmem>>, vector<256x2xbf16>
    %cst = arith.constant dense<0.000000e+00> : vector<16x2xf32>
    %2 = tpu.matmul %0, %1, %cst {dimension_numbers = #tpu.dot_dimension_numbers<[1], [0], [0], [1], [0, 0, 1, 1], [], []>} : vector<16x256xbf16>, vector<256x2xbf16>, vector<16x2xf32> -> vector<16x2xf32>
    %c0_3 = arith.constant 0 : index
    %c0_4 = arith.constant 0 : index
    %3 = vector.load %arg3[%c0_3, %c0_4] : memref<16x1xf32, #tpu.memory_space<vmem>>, vector<16x1xf32>
    %4 = vector.broadcast %3 : vector<16x1xf32> to vector<16x2xf32>
    %5 = arith.addf %2, %4 : vector<16x2xf32>
    %c0_5 = arith.constant 0 : index
    %c0_6 = arith.constant 0 : index
    %6 = vector.load %arg4[%c0_5, %c0_6] : memref<16x2xf32, #tpu.memory_space<vmem>>, vector<16x2xf32>
    tpu.vector_store %arg4[%c0_5, %c0_6], %5 {strides = array<i32>} : memref<16x2xf32, #tpu.memory_space<vmem>>, vector<16x2xf32>,
    return
  }
  func.func @transform_0(%arg0: i32) -> (i32, i32) {
    %c0_i32 = arith.constant 0 : i32
    %c0_i32_0 = arith.constant 0 : i32
    return %c0_i32, %arg0 : i32, i32
  }
  func.func @transform_1(%arg0: i32) -> (i32, i32) {
    %c0_i32 = arith.constant 0 : i32
    %c0_i32_0 = arith.constant 0 : i32
    %c0_i32_1 = arith.constant 0 : i32
    return %c0_i32, %c0_i32_0 : i32, i32
  }
  func.func @transform_2(%arg0: i32) -> (i32, i32) {
    %c0_i32 = arith.constant 0 : i32
    %c0_i32_0 = arith.constant 0 : i32
    %c0_i32_1 = arith.constant 0 : i32
    return %c0_i32, %c0_i32_0 : i32, i32
  }
  func.func @transform_3(%arg0: i32) -> (i32, i32) {
    %c0_i32 = arith.constant 0 : i32
    %c0_i32_0 = arith.constant 0 : i32
    return %c0_i32, %arg0 : i32, i32
  }
}

</mosaic_0001>

<llo_original>
// kernel: _lambda_.6
$region0: #{_lambda_.6}
  #allocation0 [shape = 'u32[]', space=smem, size = 0x4, offset = 0x4, fixed_abs, tag = 'smem constant byte address 0x4 - core index']
  #allocation1 [shape = 'u32[144,128]{1,0:T(1,128)}', space=vmem, size = 0x12000, scoped, tag = 'internal scratch']
  %s0 = inlined_call_operand.vmem [shape: bf16[48,128], index: 0, kind: input, shape index: {}]
  %s1 = inlined_call_operand.vmem [shape: bf16[8,48], index: 1, kind: input, shape index: {}]
  %s2 = inlined_call_operand.vmem [shape: f32[8,1], index: 2, kind: input, shape index: {}]
  %s3 = inlined_call_operand.vmem [shape: f32[8,1], index: 3, kind: input, shape index: {}]
  %s4 = inlined_call_operand.vmem [shape: bf16[8,128], index: 4, kind: output, shape index: {}]
  %s5 = sld [smem:[#allocation0]]
  $region26: #{_lambda_.6} parent=0
    _
  %s7 = ssub.s32 1, %s5
  %s8 = scalar_select 0, %s7, %s5
  // Predicated region
  $region2: #{_lambda_.6} parent=0 // pred_check
    _
  $region3: #{_lambda_.6} parent=0 // pred_check_branch
    %10 = sbr.rel (0) target = $region5
  $region4: #{_lambda_.6} parent=0 // pred_region
    _
  $region5: #{_lambda_.6} parent=0 // pred_fallthru
    _
  // Predicated region
  $region6: #{_lambda_.6} parent=0 // pred_check
    _
  $region7: #{_lambda_.6} parent=0 // pred_check_branch
    %12 = sbr.rel (0) target = $region9
  $region8: #{_lambda_.6} parent=0 // pred_region
    _
  $region9: #{_lambda_.6} parent=0 // pred_fallthru
    _
  // Predicated region
  $region10: #{_lambda_.6} parent=0 // pred_check
    _
  $region11: #{_lambda_.6} parent=0 // pred_check_branch
    %14 = sbr.rel (0) target = $region13
  $region12: #{_lambda_.6} parent=0 // pred_region
    _
  $region13: #{_lambda_.6} parent=0 // pred_fallthru
    _
  // Predicated region
  $region14: #{_lambda_.6} parent=0 // pred_check
    _
  $region15: #{_lambda_.6} parent=0 // pred_check_branch
    %16 = sbr.rel (0) target = $region17
  $region16: #{_lambda_.6} parent=0 // pred_region
    _
  $region17: #{_lambda_.6} parent=0 // pred_fallthru
    _
  %v18 = vld [vmem:[%s1] sm:$0xf]
  %v19 = vld [vmem:[%s0] sm:$0xf]
  %v20 = vld [vmem:[%s0 + $0x4] sm:$0xf]
  %v21 = vld [vmem:[%s0 + $0x8] sm:$0xf]
  %v22 = vld [vmem:[%s0 + $0xc] sm:$0xf]
  %v23 = vld [vmem:[%s0 + $0x10] sm:$0xf]
  %v24 = vld [vmem:[%s0 + $0x14] sm:$0xf]
  %v31 = vunpack.c.l.b16 %v19
  %v32 = vunpack.c.l.b16 %v20
  %v33 = vunpack.c.l.b16 %v21
  %v34 = vunpack.c.l.b16 %v22
  %v35 = vunpack.c.l.b16 %v23
  %v36 = vunpack.c.l.b16 %v24
  %v37 = vpack.c.b16 %v32, %v31
  %v38 = vpack.c.b16 %v34, %v33
  %v39 = vpack.c.b16 %v36, %v35
  %vm43 = vcmask 392192
  %v45 = vsel %vm43, %v18, 0
  %47 = vmatprep.subr.bf16.mxu0 0
  %48 = vmatpush1.bf16.msra.mxu0 0
  %49 = vmatprep.subr.bf16.mxu0 0
  %50 = vmatpush1.bf16.msra.mxu0 0
  %51 = vmatprep.subr.bf16.mxu0 0
  %52 = vmatpush1.bf16.msra.mxu0 0
  %53 = vmatprep.subr.bf16.mxu0 0
  %54 = vmatpush1.bf16.msra.mxu0 0
  %55 = vmatprep.subr.bf16.mxu0 0
  %56 = vmatpush1.bf16.msra.mxu0 0
  %57 = vmatprep.subr.bf16.mxu0 0
  %58 = vmatpush1.bf16.msra.mxu0 %v39
  %59 = vmatprep.subr.bf16.mxu0 0
  %60 = vmatpush1.bf16.msra.mxu0 %v38
  %61 = vmatprep.subr.bf16.mxu0 0
  %62 = vmatpush1.bf16.msra.mxu0 %v37
  %63 = vmatprep.subr.bf16.mxu0 0
  %64 = vmatpush2.bf16.msra.mxu0 0
  %65 = vmatprep.subr.bf16.mxu0 0
  %66 = vmatpush2.bf16.msra.mxu0 0
  %67 = vmatprep.subr.bf16.mxu0 0
  %68 = vmatpush2.bf16.msra.mxu0 0
  %69 = vmatprep.subr.bf16.mxu0 0
  %70 = vmatpush2.bf16.msra.mxu0 0
  %71 = vmatprep.subr.bf16.mxu0 0
  %72 = vmatpush2.bf16.msra.mxu0 0
  %73 = vmatprep.subr.bf16.mxu0 0
  %74 = vmatpush2.bf16.msra.mxu0 0
  %75 = vmatprep.subr.bf16.mxu0 0
  %76 = vmatpush2.bf16.msra.mxu0 0
  %77 = vmatprep.subr.bf16.mxu0 0
  %78 = vmatpush2.bf16.msra.mxu0 0
  %79 = vmatprep.mubr.bf16.mxu0 0
  %80 = vmatmul.mubr.bf16.gmra.mxu0 %v45
  %v81 = vpop.f32.mrf.mxu0
  %v82 = vadd.f32 0.0, %v81
  %v83 = vpop.f32.mrf.mxu0
  %v84 = vpop.f32.mrf.mxu0
  %v85 = vpop.f32.mrf.mxu0
  %86 = vdwg.mxu0
  %v87 = vld [vmem:[%s2] sm:$0xff]
  %89 = vset.pattern.permute.xlu0 0
  %90 = vperm.xlu0 %89, %v87
  %v91 = vpop.permute.xlu0 %90
  %v93 = vmul.f32 %v82, %v91
  %v94 = vld [vmem:[%s3] sm:$0xff]
  %96 = vset.pattern.permute.xlu0 0
  %97 = vperm.xlu0 %96, %v94
  %v98 = vpop.permute.xlu0 %97
  %v100 = vadd.f32 %v93, %v98
  %vm101 = vcmp.ge.f32.partialorder %v100, 0.0
  %v102 = vmul.f32 %v100, 0.01
  %v103 = vsel %vm101, %v100, %v102
  %v104 = vpack.c.bf16 %v103, %v103
  %105 = vst [vmem:[%s4] sm:$0xf] %v104
  // Predicated region
  $region18: #{_lambda_.6} parent=0 // pred_check
    _
  $region19: #{_lambda_.6} parent=0 // pred_check_branch
    %107 = sbr.rel (0) target = $region21
  $region20: #{_lambda_.6} parent=0 // pred_region
    _
  $region21: #{_lambda_.6} parent=0 // pred_fallthru
    _
  // Predicated region
  $region22: #{_lambda_.6} parent=0 // pred_check
    _
  $region23: #{_lambda_.6} parent=0 // pred_check_branch
    %109 = sbr.rel (0) target = $region25
  $region24: #{_lambda_.6} parent=0 // pred_region
    _
  $region25: #{_lambda_.6} parent=0 // pred_fallthru
    _

// kernel: _lambda_.5
$region0: #{_lambda_.5}
  #allocation0 [shape = 'u32[]', space=smem, size = 0x4, offset = 0x4, fixed_abs, tag = 'smem constant byte address 0x4 - core index']
  #allocation1 [shape = 'u32[144,128]{1,0:T(1,128)}', space=vmem, size = 0x12000, scoped, tag = 'internal scratch']
  %s0 = inlined_call_operand.vmem [shape: bf16[48,128], index: 0, kind: input, shape index: {}]
  %s1 = inlined_call_operand.vmem [shape: f32[1,48,1], index: 1, kind: output, shape index: {0}]
  %s2 = inlined_call_operand.vmem [shape: f32[1,48,48], index: 2, kind: output, shape index: {1}]
  %3 = xla_tuple %s1, %s2
  %s4 = sld [smem:[#allocation0]]
  $region26: #{_lambda_.5} parent=0
    _
  %s6 = ssub.s32 1, %s4
  %s7 = scalar_select 0, %s6, %s4
  // Predicated region
  $region2: #{_lambda_.5} parent=0 // pred_check
    _
  $region3: #{_lambda_.5} parent=0 // pred_check_branch
    %9 = sbr.rel (0) target = $region5
  $region4: #{_lambda_.5} parent=0 // pred_region
    %s10 = sadd.s32 0, 0
    %p11 = scmp.lt.s32.totalorder %s10, 0
    %s12 = scalar_select %p11, %s10, 0
    %s13 = smul.addr %s12, 4
    %s14 = scalar_lea.vmem %s0, %s13
    %s15 = sadd.s32 0, 0
  $region5: #{_lambda_.5} parent=0 // pred_fallthru
    _
  %s16 = sadd.s32 0, 0
  %p17 = scmp.lt.s32.totalorder %s16, 0
  %s18 = scalar_select %p17, %s16, 0
  %s19 = smul.addr %s18, 4
  %s20 = scalar_lea.vmem %s0, %s19
  %s21 = sadd.s32 0, 0
  %p22 = scmp.lt.s32.totalorder %s21, 0
  %s23 = scalar_select %p22, %s21, 0
  %s24 = smul.addr %s23, 4
  %s25 = scalar_lea.vmem %s0, %s24
  %s26 = sadd.s32 0, 0
  %p28 = scmp.eq.s32.totalorder 0, 0
  // Predicated region
  $region6: #{_lambda_.5} parent=0 // pred_check
    %p29 = pneg %p28
  $region7: #{_lambda_.5} parent=0 // pred_check_branch
    %31 = sbr.rel (%p29) target = $region9
  $region8: #{_lambda_.5} parent=0 // pred_region
    %vm32 = vcmask 7168
    %33 = vst.msk [vmem:[%s1] sm:$0xff] %vm32, 0.0
    %34 = vst.msk [vmem:[%s1 + $0x8] sm:$0xff] %vm32, 0.0
    %35 = vst.msk [vmem:[%s1 + $0x10] sm:$0xff] %vm32, 0.0
    %36 = vst.msk [vmem:[%s1 + $0x18] sm:$0xff] %vm32, 0.0
    %37 = vst.msk [vmem:[%s1 + $0x20] sm:$0xff] %vm32, 0.0
    %38 = vst.msk [vmem:[%s1 + $0x28] sm:$0xff] %vm32, 0.0
    %vm39 = vcmask 392192
    %40 = vst.msk [vmem:[%s2] sm:$0xff] %vm39, 0.0
    %41 = vst.msk [vmem:[%s2 + $0x8] sm:$0xff] %vm39, 0.0
    %42 = vst.msk [vmem:[%s2 + $0x10] sm:$0xff] %vm39, 0.0
    %43 = vst.msk [vmem:[%s2 + $0x18] sm:$0xff] %vm39, 0.0
    %44 = vst.msk [vmem:[%s2 + $0x20] sm:$0xff] %vm39, 0.0
    %45 = vst.msk [vmem:[%s2 + $0x28] sm:$0xff] %vm39, 0.0
  $region9: #{_lambda_.5} parent=0 // pred_fallthru
    _
  %v46 = vld [vmem:[%s25] sm:$0xf]
  %v47 = vld [vmem:[%s25 + $0x4] sm:$0xf]
  %v48 = vld [vmem:[%s25 + $0x8] sm:$0xf]
  %v49 = vld [vmem:[%s25 + $0xc] sm:$0xf]
  %v50 = vld [vmem:[%s25 + $0x10] sm:$0xf]
  %v51 = vld [vmem:[%s25 + $0x14] sm:$0xf]
  %v52 = vld [vmem:[%s1] sm:$0xff]
  %v53 = vld [vmem:[%s1 + $0x8] sm:$0xff]
  %v54 = vld [vmem:[%s1 + $0x10] sm:$0xff]
  %v55 = vld [vmem:[%s1 + $0x18] sm:$0xff]
  %v56 = vld [vmem:[%s1 + $0x20] sm:$0xff]
  %v57 = vld [vmem:[%s1 + $0x28] sm:$0xff]
  %v58 = vunpack.c.l.bf16 %v46
  %v59 = vunpack.c.l.bf16 %v47
  %v60 = vunpack.c.l.bf16 %v48
  %v61 = vunpack.c.l.bf16 %v49
  %v62 = vunpack.c.l.bf16 %v50
  %v63 = vunpack.c.l.bf16 %v51
  %64 = vadd.xlane.f32.xlu0 %v58
  %v65 = vpop.xlane.xlu0 %64
  %66 = vadd.xlane.f32.xlu0 %v59
  %v67 = vpop.xlane.xlu0 %66
  %68 = vadd.xlane.f32.xlu0 %v60
  %v69 = vpop.xlane.xlu0 %68
  %70 = vadd.xlane.f32.xlu0 %v61
  %v71 = vpop.xlane.xlu0 %70
  %72 = vadd.xlane.f32.xlu0 %v62
  %v73 = vpop.xlane.xlu0 %72
  %74 = vadd.xlane.f32.xlu0 %v63
  %v75 = vpop.xlane.xlu0 %74
  %v76 = vadd.f32 %v52, %v65
  %v77 = vadd.f32 %v53, %v67
  %v78 = vadd.f32 %v54, %v69
  %v79 = vadd.f32 %v55, %v71
  %v80 = vadd.f32 %v56, %v73
  %v81 = vadd.f32 %v57, %v75
  %vm82 = vcmask 7168
  %83 = vst.msk [vmem:[%s1] sm:$0xff] %vm82, %v76
  %84 = vst.msk [vmem:[%s1 + $0x8] sm:$0xff] %vm82, %v77
  %85 = vst.msk [vmem:[%s1 + $0x10] sm:$0xff] %vm82, %v78
  %86 = vst.msk [vmem:[%s1 + $0x18] sm:$0xff] %vm82, %v79
  %87 = vst.msk [vmem:[%s1 + $0x20] sm:$0xff] %vm82, %v80
  %88 = vst.msk [vmem:[%s1 + $0x28] sm:$0xff] %vm82, %v81
  %v89 = vld [vmem:[%s2] sm:$0xff]
  %v90 = vld [vmem:[%s2 + $0x8] sm:$0xff]
  %v91 = vld [vmem:[%s2 + $0x10] sm:$0xff]
  %v92 = vld [vmem:[%s2 + $0x18] sm:$0xff]
  %v93 = vld [vmem:[%s2 + $0x20] sm:$0xff]
  %v94 = vld [vmem:[%s2 + $0x28] sm:$0xff]
  %v101 = vunpack.c.l.b16 %v46
  %v102 = vunpack.c.l.b16 %v47
  %v103 = vunpack.c.l.b16 %v48
  %v104 = vunpack.c.l.b16 %v49
  %v105 = vunpack.c.l.b16 %v50
  %v106 = vunpack.c.l.b16 %v51
  %v107 = vpack.c.b16 %v102, %v101
  %v108 = vpack.c.b16 %v104, %v103
  %v109 = vpack.c.b16 %v106, %v105
  %113 = vmatprep.subr.bf16.mxu0 0
  %114 = vmatpush1.bf16.xpose.msra.mxu0 0
  %115 = vmatprep.subr.bf16.mxu0 0
  %116 = vmatpush1.bf16.xpose.msra.mxu0 0
  %117 = vmatprep.subr.bf16.mxu0 0
  %118 = vmatpush1.bf16.xpose.msra.mxu0 0
  %119 = vmatprep.subr.bf16.mxu0 0
  %120 = vmatpush1.bf16.xpose.msra.mxu0 0
  %121 = vmatprep.subr.bf16.mxu0 0
  %122 = vmatpush1.bf16.xpose.msra.mxu0 0
  %123 = vmatprep.subr.bf16.mxu0 0
  %124 = vmatpush1.bf16.xpose.msra.mxu0 %v109
  %125 = vmatprep.subr.bf16.mxu0 0
  %126 = vmatpush1.bf16.xpose.msra.mxu0 %v108
  %127 = vmatprep.subr.bf16.mxu0 0
  %128 = vmatpush1.bf16.xpose.msra.mxu0 %v107
  %129 = vmatprep.subr.bf16.mxu0 0
  %130 = vmatpush2.bf16.xpose.msra.mxu0 0
  %131 = vmatprep.subr.bf16.mxu0 0
  %132 = vmatpush2.bf16.xpose.msra.mxu0 0
  %133 = vmatprep.subr.bf16.mxu0 0
  %134 = vmatpush2.bf16.xpose.msra.mxu0 0
  %135 = vmatprep.subr.bf16.mxu0 0
  %136 = vmatpush2.bf16.xpose.msra.mxu0 0
  %137 = vmatprep.subr.bf16.mxu0 0
  %138 = vmatpush2.bf16.xpose.msra.mxu0 0
  %139 = vmatprep.subr.bf16.mxu0 0
  %140 = vmatpush2.bf16.xpose.msra.mxu0 0
  %141 = vmatprep.subr.bf16.mxu0 0
  %142 = vmatpush2.bf16.xpose.msra.mxu0 0
  %143 = vmatprep.subr.bf16.mxu0 0
  %144 = vmatpush2.bf16.xpose.msra.mxu0 0
  %145 = vmatprep.mubr.bf16.mxu0 0
  %146 = vmatmul.mubr.bf16.gmra.mxu0 %v107
  %v147 = vpop.f32.mrf.mxu0
  %v148 = vadd.f32 0.0, %v147
  %v149 = vpop.f32.mrf.mxu0
  %v150 = vpop.f32.mrf.mxu0
  %v151 = vadd.f32 0.0, %v150
  %v152 = vpop.f32.mrf.mxu0
  %153 = vmatprep.mubr.bf16.mxu0 0
  %154 = vmatmul.mubr.bf16.gmra.mxu0 %v108
  %v155 = vpop.f32.mrf.mxu0
  %v156 = vadd.f32 0.0, %v155
  %v157 = vpop.f32.mrf.mxu0
  %v158 = vpop.f32.mrf.mxu0
  %v159 = vadd.f32 0.0, %v158
  %v160 = vpop.f32.mrf.mxu0
  %161 = vmatprep.mubr.bf16.mxu0 0
  %162 = vmatmul.mubr.bf16.gmra.mxu0 %v109
  %v163 = vpop.f32.mrf.mxu0
  %v164 = vadd.f32 0.0, %v163
  %v165 = vpop.f32.mrf.mxu0
  %v166 = vpop.f32.mrf.mxu0
  %v167 = vadd.f32 0.0, %v166
  %v168 = vpop.f32.mrf.mxu0
  %169 = vdwg.mxu0
  %v170 = vadd.f32 %v89, %v148
  %v171 = vadd.f32 %v90, %v151
  %v172 = vadd.f32 %v91, %v156
  %v173 = vadd.f32 %v92, %v159
  %v174 = vadd.f32 %v93, %v164
  %v175 = vadd.f32 %v94, %v167
  %vm176 = vcmask 392192
  %177 = vst.msk [vmem:[%s2] sm:$0xff] %vm176, %v170
  %178 = vst.msk [vmem:[%s2 + $0x8] sm:$0xff] %vm176, %v171
  %179 = vst.msk [vmem:[%s2 + $0x10] sm:$0xff] %vm176, %v172
  %180 = vst.msk [vmem:[%s2 + $0x18] sm:$0xff] %vm176, %v173
  %181 = vst.msk [vmem:[%s2 + $0x20] sm:$0xff] %vm176, %v174
  %182 = vst.msk [vmem:[%s2 + $0x28] sm:$0xff] %vm176, %v175
  // Predicated region
  $region10: #{_lambda_.5} parent=0 // pred_check
    _
  $region11: #{_lambda_.5} parent=0 // pred_check_branch
    %184 = sbr.rel (0) target = $region13
  $region12: #{_lambda_.5} parent=0 // pred_region
    _
  $region13: #{_lambda_.5} parent=0 // pred_fallthru
    _
  // Predicated region
  $region14: #{_lambda_.5} parent=0 // pred_check
    _
  $region15: #{_lambda_.5} parent=0 // pred_check_branch
    %186 = sbr.rel (0) target = $region17
  $region16: #{_lambda_.5} parent=0 // pred_region
    _
  $region17: #{_lambda_.5} parent=0 // pred_fallthru
    _
  // Predicated region
  $region18: #{_lambda_.5} parent=0 // pred_check
    _
  $region19: #{_lambda_.5} parent=0 // pred_check_branch
    %188 = sbr.rel (0) target = $region21
  $region20: #{_lambda_.5} parent=0 // pred_region
    _
  $region21: #{_lambda_.5} parent=0 // pred_fallthru
    _
  // Predicated region
  $region22: #{_lambda_.5} parent=0 // pred_check
    _
  $region23: #{_lambda_.5} parent=0 // pred_check_branch
    %190 = sbr.rel (0) target = $region25
  $region24: #{_lambda_.5} parent=0 // pred_region
    _
  $region25: #{_lambda_.5} parent=0 // pred_fallthru
    _

// kernel: _lambda_.7
$region0: #{_lambda_.7}
  #allocation0 [shape = 'u32[]', space=smem, size = 0x4, offset = 0x4, fixed_abs, tag = 'smem constant byte address 0x4 - core index']
  #allocation1 [shape = 'u32[144,128]{1,0:T(1,128)}', space=vmem, size = 0x12000, scoped, tag = 'internal scratch']
  %s0 = inlined_call_operand.vmem [shape: bf16[80,32], index: 0, kind: input, shape index: {}]
  %s1 = inlined_call_operand.vmem [shape: f32[1,80,1], index: 1, kind: output, shape index: {0}]
  %s2 = inlined_call_operand.vmem [shape: f32[1,80,80], index: 2, kind: output, shape index: {1}]
  %3 = xla_tuple %s1, %s2
  %s4 = sld [smem:[#allocation0]]
  $region26: #{_lambda_.7} parent=0
    _
  %s6 = ssub.s32 1, %s4
  %s7 = scalar_select 0, %s6, %s4
  // Predicated region
  $region2: #{_lambda_.7} parent=0 // pred_check
    _
  $region3: #{_lambda_.7} parent=0 // pred_check_branch
    %9 = sbr.rel (0) target = $region5
  $region4: #{_lambda_.7} parent=0 // pred_region
    %s10 = sadd.s32 0, 0
    %p11 = scmp.lt.s32.totalorder %s10, 0
    %s12 = scalar_select %p11, %s10, 0
    %s13 = smul.addr %s12, 4
    %s14 = scalar_lea.vmem %s0, %s13
    %s15 = sadd.s32 0, 0
  $region5: #{_lambda_.7} parent=0 // pred_fallthru
    _
  %s16 = sadd.s32 0, 0
  %p17 = scmp.lt.s32.totalorder %s16, 0
  %s18 = scalar_select %p17, %s16, 0
  %s19 = smul.addr %s18, 4
  %s20 = scalar_lea.vmem %s0, %s19
  %s21 = sadd.s32 0, 0
  %p22 = scmp.lt.s32.totalorder %s21, 0
  %s23 = scalar_select %p22, %s21, 0
  %s24 = smul.addr %s23, 4
  %s25 = scalar_lea.vmem %s0, %s24
  %s26 = sadd.s32 0, 0
  %p28 = scmp.eq.s32.totalorder 0, 0
  // Predicated region
  $region6: #{_lambda_.7} parent=0 // pred_check
    %p29 = pneg %p28
  $region7: #{_lambda_.7} parent=0 // pred_check_branch
    %31 = sbr.rel (%p29) target = $region9
  $region8: #{_lambda_.7} parent=0 // pred_region
    %vm32 = vcmask 7168
    %33 = vst.msk [vmem:[%s1] sm:$0xff] %vm32, 0.0
    %34 = vst.msk [vmem:[%s1 + $0x8] sm:$0xff] %vm32, 0.0
    %35 = vst.msk [vmem:[%s1 + $0x10] sm:$0xff] %vm32, 0.0
    %36 = vst.msk [vmem:[%s1 + $0x18] sm:$0xff] %vm32, 0.0
    %37 = vst.msk [vmem:[%s1 + $0x20] sm:$0xff] %vm32, 0.0
    %38 = vst.msk [vmem:[%s1 + $0x28] sm:$0xff] %vm32, 0.0
    %39 = vst.msk [vmem:[%s1 + $0x30] sm:$0xff] %vm32, 0.0
    %40 = vst.msk [vmem:[%s1 + $0x38] sm:$0xff] %vm32, 0.0
    %41 = vst.msk [vmem:[%s1 + $0x40] sm:$0xff] %vm32, 0.0
    %42 = vst.msk [vmem:[%s1 + $0x48] sm:$0xff] %vm32, 0.0
    %vm43 = vcmask 654336
    %44 = vst.msk [vmem:[%s2] sm:$0xff] %vm43, 0.0
    %45 = vst.msk [vmem:[%s2 + $0x8] sm:$0xff] %vm43, 0.0
    %46 = vst.msk [vmem:[%s2 + $0x10] sm:$0xff] %vm43, 0.0
    %47 = vst.msk [vmem:[%s2 + $0x18] sm:$0xff] %vm43, 0.0
    %48 = vst.msk [vmem:[%s2 + $0x20] sm:$0xff] %vm43, 0.0
    %49 = vst.msk [vmem:[%s2 + $0x28] sm:$0xff] %vm43, 0.0
    %50 = vst.msk [vmem:[%s2 + $0x30] sm:$0xff] %vm43, 0.0
    %51 = vst.msk [vmem:[%s2 + $0x38] sm:$0xff] %vm43, 0.0
    %52 = vst.msk [vmem:[%s2 + $0x40] sm:$0xff] %vm43, 0.0
    %53 = vst.msk [vmem:[%s2 + $0x48] sm:$0xff] %vm43, 0.0
  $region9: #{_lambda_.7} parent=0 // pred_fallthru
    _
  %v54 = vld [vmem:[%s25] sm:$0xf]
  %v55 = vld [vmem:[%s25 + $0x4] sm:$0xf]
  %v56 = vld [vmem:[%s25 + $0x8] sm:$0xf]
  %v57 = vld [vmem:[%s25 + $0xc] sm:$0xf]
  %v58 = vld [vmem:[%s25 + $0x10] sm:$0xf]
  %v59 = vld [vmem:[%s25 + $0x14] sm:$0xf]
  %v60 = vld [vmem:[%s25 + $0x18] sm:$0xf]
  %v61 = vld [vmem:[%s25 + $0x1c] sm:$0xf]
  %v62 = vld [vmem:[%s25 + $0x20] sm:$0xf]
  %v63 = vld [vmem:[%s25 + $0x24] sm:$0xf]
  %v64 = vld [vmem:[%s1] sm:$0xff]
  %v65 = vld [vmem:[%s1 + $0x8] sm:$0xff]
  %v66 = vld [vmem:[%s1 + $0x10] sm:$0xff]
  %v67 = vld [vmem:[%s1 + $0x18] sm:$0xff]
  %v68 = vld [vmem:[%s1 + $0x20] sm:$0xff]
  %v69 = vld [vmem:[%s1 + $0x28] sm:$0xff]
  %v70 = vld [vmem:[%s1 + $0x30] sm:$0xff]
  %v71 = vld [vmem:[%s1 + $0x38] sm:$0xff]
  %v72 = vld [vmem:[%s1 + $0x40] sm:$0xff]
  %v73 = vld [vmem:[%s1 + $0x48] sm:$0xff]
  %v74 = vunpack.c.l.bf16 %v54
  %v75 = vunpack.c.l.bf16 %v55
  %v76 = vunpack.c.l.bf16 %v56
  %v77 = vunpack.c.l.bf16 %v57
  %v78 = vunpack.c.l.bf16 %v58
  %v79 = vunpack.c.l.bf16 %v59
  %v80 = vunpack.c.l.bf16 %v60
  %v81 = vunpack.c.l.bf16 %v61
  %v82 = vunpack.c.l.bf16 %v62
  %v83 = vunpack.c.l.bf16 %v63
  %vm84 = vcmask 261120
  %v85 = vsel %vm84, %v74, 0.0
  %86 = vadd.xlane.f32.xlu0 %v85
  %v87 = vpop.xlane.xlu0 %86
  %v88 = vsel %vm84, %v75, 0.0
  %89 = vadd.xlane.f32.xlu0 %v88
  %v90 = vpop.xlane.xlu0 %89
  %v91 = vsel %vm84, %v76, 0.0
  %92 = vadd.xlane.f32.xlu0 %v91
  %v93 = vpop.xlane.xlu0 %92
  %v94 = vsel %vm84, %v77, 0.0
  %95 = vadd.xlane.f32.xlu0 %v94
  %v96 = vpop.xlane.xlu0 %95
  %v97 = vsel %vm84, %v78, 0.0
  %98 = vadd.xlane.f32.xlu0 %v97
  %v99 = vpop.xlane.xlu0 %98
  %v100 = vsel %vm84, %v79, 0.0
  %101 = vadd.xlane.f32.xlu0 %v100
  %v102 = vpop.xlane.xlu0 %101
  %v103 = vsel %vm84, %v80, 0.0
  %104 = vadd.xlane.f32.xlu0 %v103
  %v105 = vpop.xlane.xlu0 %104
  %v106 = vsel %vm84, %v81, 0.0
  %107 = vadd.xlane.f32.xlu0 %v106
  %v108 = vpop.xlane.xlu0 %107
  %v109 = vsel %vm84, %v82, 0.0
  %110 = vadd.xlane.f32.xlu0 %v109
  %v111 = vpop.xlane.xlu0 %110
  %v112 = vsel %vm84, %v83, 0.0
  %113 = vadd.xlane.f32.xlu0 %v112
  %v114 = vpop.xlane.xlu0 %113
  %v115 = vadd.f32 %v64, %v87
  %v116 = vadd.f32 %v65, %v90
  %v117 = vadd.f32 %v66, %v93
  %v118 = vadd.f32 %v67, %v96
  %v119 = vadd.f32 %v68, %v99
  %v120 = vadd.f32 %v69, %v102
  %v121 = vadd.f32 %v70, %v105
  %v122 = vadd.f32 %v71, %v108
  %v123 = vadd.f32 %v72, %v111
  %v124 = vadd.f32 %v73, %v114
  %vm125 = vcmask 7168
  %126 = vst.msk [vmem:[%s1] sm:$0xff] %vm125, %v115
  %127 = vst.msk [vmem:[%s1 + $0x8] sm:$0xff] %vm125, %v116
  %128 = vst.msk [vmem:[%s1 + $0x10] sm:$0xff] %vm125, %v117
  %129 = vst.msk [vmem:[%s1 + $0x18] sm:$0xff] %vm125, %v118
  %130 = vst.msk [vmem:[%s1 + $0x20] sm:$0xff] %vm125, %v119
  %131 = vst.msk [vmem:[%s1 + $0x28] sm:$0xff] %vm125, %v120
  %132 = vst.msk [vmem:[%s1 + $0x30] sm:$0xff] %vm125, %v121
  %133 = vst.msk [vmem:[%s1 + $0x38] sm:$0xff] %vm125, %v122
  %134 = vst.msk [vmem:[%s1 + $0x40] sm:$0xff] %vm125, %v123
  %135 = vst.msk [vmem:[%s1 + $0x48] sm:$0xff] %vm125, %v124
  %v136 = vld [vmem:[%s2] sm:$0xff]
  %v137 = vld [vmem:[%s2 + $0x8] sm:$0xff]
  %v138 = vld [vmem:[%s2 + $0x10] sm:$0xff]
  %v139 = vld [vmem:[%s2 + $0x18] sm:$0xff]
  %v140 = vld [vmem:[%s2 + $0x20] sm:$0xff]
  %v141 = vld [vmem:[%s2 + $0x28] sm:$0xff]
  %v142 = vld [vmem:[%s2 + $0x30] sm:$0xff]
  %v143 = vld [vmem:[%s2 + $0x38] sm:$0xff]
  %v144 = vld [vmem:[%s2 + $0x40] sm:$0xff]
  %v145 = vld [vmem:[%s2 + $0x48] sm:$0xff]
  %v156 = vunpack.c.l.b16 %v54
  %v157 = vunpack.c.l.b16 %v55
  %v158 = vunpack.c.l.b16 %v56
  %v159 = vunpack.c.l.b16 %v57
  %v160 = vunpack.c.l.b16 %v58
  %v161 = vunpack.c.l.b16 %v59
  %v162 = vunpack.c.l.b16 %v60
  %v163 = vunpack.c.l.b16 %v61
  %v164 = vunpack.c.l.b16 %v62
  %v165 = vunpack.c.l.b16 %v63
  %v166 = vpack.c.b16 %v157, %v156
  %v167 = vpack.c.b16 %v159, %v158
  %v168 = vpack.c.b16 %v161, %v160
  %v169 = vpack.c.b16 %v163, %v162
  %v170 = vpack.c.b16 %v165, %v164
  %v172 = vsel %vm84, %v166, 0
  %v175 = vsel %vm84, %v167, 0
  %v178 = vsel %vm84, %v168, 0
  %v181 = vsel %vm84, %v169, 0
  %v184 = vsel %vm84, %v170, 0
  %186 = vmatprep.subr.bf16.mxu0 0
  %187 = vmatpush1.bf16.xpose.msra.mxu0 0
  %188 = vmatprep.subr.bf16.mxu0 0
  %189 = vmatpush1.bf16.xpose.msra.mxu0 0
  %190 = vmatprep.subr.bf16.mxu0 0
  %191 = vmatpush1.bf16.xpose.msra.mxu0 0
  %192 = vmatprep.subr.bf16.mxu0 0
  %193 = vmatpush1.bf16.xpose.msra.mxu0 %v184
  %194 = vmatprep.subr.bf16.mxu0 0
  %195 = vmatpush1.bf16.xpose.msra.mxu0 %v181
  %196 = vmatprep.subr.bf16.mxu0 0
  %197 = vmatpush1.bf16.xpose.msra.mxu0 %v178
  %198 = vmatprep.subr.bf16.mxu0 0
  %199 = vmatpush1.bf16.xpose.msra.mxu0 %v175
  %200 = vmatprep.subr.bf16.mxu0 0
  %201 = vmatpush1.bf16.xpose.msra.mxu0 %v172
  %202 = vmatprep.subr.bf16.mxu0 0
  %203 = vmatpush2.bf16.xpose.msra.mxu0 0
  %204 = vmatprep.subr.bf16.mxu0 0
  %205 = vmatpush2.bf16.xpose.msra.mxu0 0
  %206 = vmatprep.subr.bf16.mxu0 0
  %207 = vmatpush2.bf16.xpose.msra.mxu0 0
  %208 = vmatprep.subr.bf16.mxu0 0
  %209 = vmatpush2.bf16.xpose.msra.mxu0 0
  %210 = vmatprep.subr.bf16.mxu0 0
  %211 = vmatpush2.bf16.xpose.msra.mxu0 0
  %212 = vmatprep.subr.bf16.mxu0 0
  %213 = vmatpush2.bf16.xpose.msra.mxu0 0
  %214 = vmatprep.subr.bf16.mxu0 0
  %215 = vmatpush2.bf16.xpose.msra.mxu0 0
  %216 = vmatprep.subr.bf16.mxu0 0
  %217 = vmatpush2.bf16.xpose.msra.mxu0 0
  %218 = vmatprep.mubr.bf16.mxu0 0
  %219 = vmatmul.mubr.bf16.gmra.mxu0 %v172
  %v220 = vpop.f32.mrf.mxu0
  %v221 = vadd.f32 0.0, %v220
  %v222 = vpop.f32.mrf.mxu0
  %v223 = vpop.f32.mrf.mxu0
  %v224 = vadd.f32 0.0, %v223
  %v225 = vpop.f32.mrf.mxu0
  %226 = vmatprep.mubr.bf16.mxu0 0
  %227 = vmatmul.mubr.bf16.gmra.mxu0 %v175
  %v228 = vpop.f32.mrf.mxu0
  %v229 = vadd.f32 0.0, %v228
  %v230 = vpop.f32.mrf.mxu0
  %v231 = vpop.f32.mrf.mxu0
  %v232 = vadd.f32 0.0, %v231
  %v233 = vpop.f32.mrf.mxu0
  %234 = vmatprep.mubr.bf16.mxu0 0
  %235 = vmatmul.mubr.bf16.gmra.mxu0 %v178
  %v236 = vpop.f32.mrf.mxu0
  %v237 = vadd.f32 0.0, %v236
  %v238 = vpop.f32.mrf.mxu0
  %v239 = vpop.f32.mrf.mxu0
  %v240 = vadd.f32 0.0, %v239
  %v241 = vpop.f32.mrf.mxu0
  %242 = vmatprep.mubr.bf16.mxu0 0
  %243 = vmatmul.mubr.bf16.gmra.mxu0 %v181
  %v244 = vpop.f32.mrf.mxu0
  %v245 = vadd.f32 0.0, %v244
  %v246 = vpop.f32.mrf.mxu0
  %v247 = vpop.f32.mrf.mxu0
  %v248 = vadd.f32 0.0, %v247
  %v249 = vpop.f32.mrf.mxu0
  %250 = vmatprep.mubr.bf16.mxu0 0
  %251 = vmatmul.mubr.bf16.gmra.mxu0 %v184
  %v252 = vpop.f32.mrf.mxu0
  %v253 = vadd.f32 0.0, %v252
  %v254 = vpop.f32.mrf.mxu0
  %v255 = vpop.f32.mrf.mxu0
  %v256 = vadd.f32 0.0, %v255
  %v257 = vpop.f32.mrf.mxu0
  %258 = vdwg.mxu0
  %v259 = vadd.f32 %v136, %v221
  %v260 = vadd.f32 %v137, %v224
  %v261 = vadd.f32 %v138, %v229
  %v262 = vadd.f32 %v139, %v232
  %v263 = vadd.f32 %v140, %v237
  %v264 = vadd.f32 %v141, %v240
  %v265 = vadd.f32 %v142, %v245
  %v266 = vadd.f32 %v143, %v248
  %v267 = vadd.f32 %v144, %v253
  %v268 = vadd.f32 %v145, %v256
  %vm269 = vcmask 654336
  %270 = vst.msk [vmem:[%s2] sm:$0xff] %vm269, %v259
  %271 = vst.msk [vmem:[%s2 + $0x8] sm:$0xff] %vm269, %v260
  %272 = vst.msk [vmem:[%s2 + $0x10] sm:$0xff] %vm269, %v261
  %273 = vst.msk [vmem:[%s2 + $0x18] sm:$0xff] %vm269, %v262
  %274 = vst.msk [vmem:[%s2 + $0x20] sm:$0xff] %vm269, %v263
  %275 = vst.msk [vmem:[%s2 + $0x28] sm:$0xff] %vm269, %v264
  %276 = vst.msk [vmem:[%s2 + $0x30] sm:$0xff] %vm269, %v265
  %277 = vst.msk [vmem:[%s2 + $0x38] sm:$0xff] %vm269, %v266
  %278 = vst.msk [vmem:[%s2 + $0x40] sm:$0xff] %vm269, %v267
  %279 = vst.msk [vmem:[%s2 + $0x48] sm:$0xff] %vm269, %v268
  // Predicated region
  $region10: #{_lambda_.7} parent=0 // pred_check
    _
  $region11: #{_lambda_.7} parent=0 // pred_check_branch
    %281 = sbr.rel (0) target = $region13
  $region12: #{_lambda_.7} parent=0 // pred_region
    _
  $region13: #{_lambda_.7} parent=0 // pred_fallthru
    _
  // Predicated region
  $region14: #{_lambda_.7} parent=0 // pred_check
    _
  $region15: #{_lambda_.7} parent=0 // pred_check_branch
    %283 = sbr.rel (0) target = $region17
  $region16: #{_lambda_.7} parent=0 // pred_region
    _
  $region17: #{_lambda_.7} parent=0 // pred_fallthru
    _
  // Predicated region
  $region18: #{_lambda_.7} parent=0 // pred_check
    _
  $region19: #{_lambda_.7} parent=0 // pred_check_branch
    %285 = sbr.rel (0) target = $region21
  $region20: #{_lambda_.7} parent=0 // pred_region
    _
  $region21: #{_lambda_.7} parent=0 // pred_fallthru
    _
  // Predicated region
  $region22: #{_lambda_.7} parent=0 // pred_check
    _
  $region23: #{_lambda_.7} parent=0 // pred_check_branch
    %287 = sbr.rel (0) target = $region25
  $region24: #{_lambda_.7} parent=0 // pred_region
    _
  $region25: #{_lambda_.7} parent=0 // pred_fallthru
    _

// kernel: _lambda_.8
$region0: #{_lambda_.8}
  #allocation0 [shape = 'u32[]', space=smem, size = 0x4, offset = 0x4, fixed_abs, tag = 'smem constant byte address 0x4 - core index']
  #allocation1 [shape = 'u32[144,128]{1,0:T(1,128)}', space=vmem, size = 0x12000, scoped, tag = 'internal scratch']
  %s0 = inlined_call_operand.vmem [shape: bf16[80,32], index: 0, kind: input, shape index: {}]
  %s1 = inlined_call_operand.vmem [shape: bf16[16,80], index: 1, kind: input, shape index: {}]
  %s2 = inlined_call_operand.vmem [shape: f32[16,1], index: 2, kind: input, shape index: {}]
  %s3 = inlined_call_operand.vmem [shape: f32[16,1], index: 3, kind: input, shape index: {}]
  %s4 = inlined_call_operand.vmem [shape: bf16[16,32], index: 4, kind: output, shape index: {}]
  %s5 = sld [smem:[#allocation0]]
  $region26: #{_lambda_.8} parent=0
    _
  %s7 = ssub.s32 1, %s5
  %s8 = scalar_select 0, %s7, %s5
  // Predicated region
  $region2: #{_lambda_.8} parent=0 // pred_check
    _
  $region3: #{_lambda_.8} parent=0 // pred_check_branch
    %10 = sbr.rel (0) target = $region5
  $region4: #{_lambda_.8} parent=0 // pred_region
    _
  $region5: #{_lambda_.8} parent=0 // pred_fallthru
    _
  // Predicated region
  $region6: #{_lambda_.8} parent=0 // pred_check
    _
  $region7: #{_lambda_.8} parent=0 // pred_check_branch
    %12 = sbr.rel (0) target = $region9
  $region8: #{_lambda_.8} parent=0 // pred_region
    _
  $region9: #{_lambda_.8} parent=0 // pred_fallthru
    _
  // Predicated region
  $region10: #{_lambda_.8} parent=0 // pred_check
    _
  $region11: #{_lambda_.8} parent=0 // pred_check_branch
    %14 = sbr.rel (0) target = $region13
  $region12: #{_lambda_.8} parent=0 // pred_region
    _
  $region13: #{_lambda_.8} parent=0 // pred_fallthru
    _
  // Predicated region
  $region14: #{_lambda_.8} parent=0 // pred_check
    _
  $region15: #{_lambda_.8} parent=0 // pred_check_branch
    %16 = sbr.rel (0) target = $region17
  $region16: #{_lambda_.8} parent=0 // pred_region
    _
  $region17: #{_lambda_.8} parent=0 // pred_fallthru
    _
  %v18 = vld [vmem:[%s1] sm:$0xf]
  %v19 = vld [vmem:[%s1 + $0x4] sm:$0xf]
  %v20 = vld [vmem:[%s0] sm:$0xf]
  %v21 = vld [vmem:[%s0 + $0x4] sm:$0xf]
  %v22 = vld [vmem:[%s0 + $0x8] sm:$0xf]
  %v23 = vld [vmem:[%s0 + $0xc] sm:$0xf]
  %v24 = vld [vmem:[%s0 + $0x10] sm:$0xf]
  %v25 = vld [vmem:[%s0 + $0x14] sm:$0xf]
  %v26 = vld [vmem:[%s0 + $0x18] sm:$0xf]
  %v27 = vld [vmem:[%s0 + $0x1c] sm:$0xf]
  %v28 = vld [vmem:[%s0 + $0x20] sm:$0xf]
  %v29 = vld [vmem:[%s0 + $0x24] sm:$0xf]
  %v32 = vunpack.c.l.b16 %v18
  %v33 = vunpack.c.l.b16 %v19
  %v34 = vpack.c.b16 %v33, %v32
  %v45 = vunpack.c.l.b16 %v20
  %v46 = vunpack.c.l.b16 %v21
  %v47 = vunpack.c.l.b16 %v22
  %v48 = vunpack.c.l.b16 %v23
  %v49 = vunpack.c.l.b16 %v24
  %v50 = vunpack.c.l.b16 %v25
  %v51 = vunpack.c.l.b16 %v26
  %v52 = vunpack.c.l.b16 %v27
  %v53 = vunpack.c.l.b16 %v28
  %v54 = vunpack.c.l.b16 %v29
  %v55 = vpack.c.b16 %v46, %v45
  %v56 = vpack.c.b16 %v48, %v47
  %v57 = vpack.c.b16 %v50, %v49
  %v58 = vpack.c.b16 %v52, %v51
  %v59 = vpack.c.b16 %v54, %v53
  %vm65 = vcmask 654336
  %v67 = vsel %vm65, %v34, 0
  %69 = vmatprep.subr.bf16.mxu0 0
  %70 = vmatpush1.bf16.msra.mxu0 0
  %71 = vmatprep.subr.bf16.mxu0 0
  %72 = vmatpush1.bf16.msra.mxu0 0
  %73 = vmatprep.subr.bf16.mxu0 0
  %74 = vmatpush1.bf16.msra.mxu0 0
  %75 = vmatprep.subr.bf16.mxu0 0
  %76 = vmatpush1.bf16.msra.mxu0 %v59
  %77 = vmatprep.subr.bf16.mxu0 0
  %78 = vmatpush1.bf16.msra.mxu0 %v58
  %79 = vmatprep.subr.bf16.mxu0 0
  %80 = vmatpush1.bf16.msra.mxu0 %v57
  %81 = vmatprep.subr.bf16.mxu0 0
  %82 = vmatpush1.bf16.msra.mxu0 %v56
  %83 = vmatprep.subr.bf16.mxu0 0
  %84 = vmatpush1.bf16.msra.mxu0 %v55
  %85 = vmatprep.subr.bf16.mxu0 0
  %86 = vmatpush2.bf16.msra.mxu0 0
  %87 = vmatprep.subr.bf16.mxu0 0
  %88 = vmatpush2.bf16.msra.mxu0 0
  %89 = vmatprep.subr.bf16.mxu0 0
  %90 = vmatpush2.bf16.msra.mxu0 0
  %91 = vmatprep.subr.bf16.mxu0 0
  %92 = vmatpush2.bf16.msra.mxu0 0
  %93 = vmatprep.subr.bf16.mxu0 0
  %94 = vmatpush2.bf16.msra.mxu0 0
  %95 = vmatprep.subr.bf16.mxu0 0
  %96 = vmatpush2.bf16.msra.mxu0 0
  %97 = vmatprep.subr.bf16.mxu0 0
  %98 = vmatpush2.bf16.msra.mxu0 0
  %99 = vmatprep.subr.bf16.mxu0 0
  %100 = vmatpush2.bf16.msra.mxu0 0
  %101 = vmatprep.mubr.bf16.mxu0 0
  %102 = vmatmul.mubr.bf16.gmra.mxu0 %v67
  %v103 = vpop.f32.mrf.mxu0
  %v104 = vadd.f32 0.0, %v103
  %v105 = vpop.f32.mrf.mxu0
  %v106 = vpop.f32.mrf.mxu0
  %v107 = vadd.f32 0.0, %v106
  %v108 = vpop.f32.mrf.mxu0
  %109 = vdwg.mxu0
  %v110 = vld [vmem:[%s2] sm:$0xff]
  %v111 = vld [vmem:[%s2 + $0x8] sm:$0xff]
  %113 = vset.pattern.permute.xlu0 0
  %114 = vperm.xlu0 %113, %v110
  %v115 = vpop.permute.xlu0 %114
  %118 = vset.pattern.permute.xlu0 0
  %119 = vperm.xlu0 %118, %v111
  %v120 = vpop.permute.xlu0 %119
  %v122 = vmul.f32 %v104, %v115
  %v123 = vmul.f32 %v107, %v120
  %v124 = vld [vmem:[%s3] sm:$0xff]
  %v125 = vld [vmem:[%s3 + $0x8] sm:$0xff]
  %127 = vset.pattern.permute.xlu0 0
  %128 = vperm.xlu0 %127, %v124
  %v129 = vpop.permute.xlu0 %128
  %132 = vset.pattern.permute.xlu0 0
  %133 = vperm.xlu0 %132, %v125
  %v134 = vpop.permute.xlu0 %133
  %v136 = vadd.f32 %v122, %v129
  %v137 = vadd.f32 %v123, %v134
  %vm138 = vcmp.ge.f32.partialorder %v136, 0.0
  %vm139 = vcmp.ge.f32.partialorder %v137, 0.0
  %v140 = vmul.f32 %v136, 0.01
  %v141 = vmul.f32 %v137, 0.01
  %v142 = vsel %vm138, %v136, %v140
  %v143 = vsel %vm139, %v137, %v141
  %v144 = vpack.c.bf16 %v143, %v142
  %v146 = vunpack.c.l.b16 %v144
  %v147 = vunpack.c.h.b16 %v144
  %v148 = vpack.c.b16 %v146, %v146
  %v149 = vpack.c.b16 %v147, %v147
  %vm152 = vcmask 257024
  %153 = vst.msk [vmem:[%s4] sm:$0xf] %vm152, %v148
  %154 = vst.msk [vmem:[%s4 + $0x4] sm:$0xf] %vm152, %v149
  // Predicated region
  $region18: #{_lambda_.8} parent=0 // pred_check
    _
  $region19: #{_lambda_.8} parent=0 // pred_check_branch
    %156 = sbr.rel (0) target = $region21
  $region20: #{_lambda_.8} parent=0 // pred_region
    _
  $region21: #{_lambda_.8} parent=0 // pred_fallthru
    _
  // Predicated region
  $region22: #{_lambda_.8} parent=0 // pred_check
    _
  $region23: #{_lambda_.8} parent=0 // pred_check_branch
    %158 = sbr.rel (0) target = $region25
  $region24: #{_lambda_.8} parent=0 // pred_region
    _
  $region25: #{_lambda_.8} parent=0 // pred_fallthru
    _

// kernel: _lambda_.9
$region0: #{_lambda_.9}
  #allocation0 [shape = 'u32[]', space=smem, size = 0x4, offset = 0x4, fixed_abs, tag = 'smem constant byte address 0x4 - core index']
  #allocation1 [shape = 'u32[144,128]{1,0:T(1,128)}', space=vmem, size = 0x12000, scoped, tag = 'internal scratch']
  %s0 = inlined_call_operand.vmem [shape: bf16[256,2], index: 0, kind: input, shape index: {}]
  %s1 = inlined_call_operand.vmem [shape: bf16[16,256], index: 1, kind: input, shape index: {}]
  %s2 = inlined_call_operand.vmem [shape: f32[16,1], index: 2, kind: input, shape index: {}]
  %s3 = inlined_call_operand.vmem [shape: f32[16,2], index: 3, kind: output, shape index: {}]
  %s4 = sld [smem:[#allocation0]]
  $region22: #{_lambda_.9} parent=0
    _
  %s6 = ssub.s32 1, %s4
  %s7 = scalar_select 0, %s6, %s4
  // Predicated region
  $region2: #{_lambda_.9} parent=0 // pred_check
    _
  $region3: #{_lambda_.9} parent=0 // pred_check_branch
    %9 = sbr.rel (0) target = $region5
  $region4: #{_lambda_.9} parent=0 // pred_region
    _
  $region5: #{_lambda_.9} parent=0 // pred_fallthru
    _
  // Predicated region
  $region6: #{_lambda_.9} parent=0 // pred_check
    _
  $region7: #{_lambda_.9} parent=0 // pred_check_branch
    %11 = sbr.rel (0) target = $region9
  $region8: #{_lambda_.9} parent=0 // pred_region
    _
  $region9: #{_lambda_.9} parent=0 // pred_fallthru
    _
  // Predicated region
  $region10: #{_lambda_.9} parent=0 // pred_check
    _
  $region11: #{_lambda_.9} parent=0 // pred_check_branch
    %13 = sbr.rel (0) target = $region13
  $region12: #{_lambda_.9} parent=0 // pred_region
    _
  $region13: #{_lambda_.9} parent=0 // pred_fallthru
    _
  %v15 = vld [vmem:[%s1] sm:$0xff]
  %v16 = vld [vmem:[%s1 + $0x8] sm:$0xff]
  %v17 = vld [vmem:[%s0] sm:$0xf]
  %v18 = vld [vmem:[%s0 + $0x4] sm:$0xf]
  %v19 = vld [vmem:[%s0 + $0x8] sm:$0xf]
  %v20 = vld [vmem:[%s0 + $0xc] sm:$0xf]
  %v21 = vld [vmem:[%s0 + $0x10] sm:$0xf]
  %v22 = vld [vmem:[%s0 + $0x14] sm:$0xf]
  %v23 = vld [vmem:[%s0 + $0x18] sm:$0xf]
  %v24 = vld [vmem:[%s0 + $0x1c] sm:$0xf]
  %v25 = vld [vmem:[%s0 + $0x20] sm:$0xf]
  %v26 = vld [vmem:[%s0 + $0x24] sm:$0xf]
  %v27 = vld [vmem:[%s0 + $0x28] sm:$0xf]
  %v28 = vld [vmem:[%s0 + $0x2c] sm:$0xf]
  %v29 = vld [vmem:[%s0 + $0x30] sm:$0xf]
  %v30 = vld [vmem:[%s0 + $0x34] sm:$0xf]
  %v31 = vld [vmem:[%s0 + $0x38] sm:$0xf]
  %v32 = vld [vmem:[%s0 + $0x3c] sm:$0xf]
  %v33 = vld [vmem:[%s0 + $0x40] sm:$0xf]
  %v34 = vld [vmem:[%s0 + $0x44] sm:$0xf]
  %v35 = vld [vmem:[%s0 + $0x48] sm:$0xf]
  %v36 = vld [vmem:[%s0 + $0x4c] sm:$0xf]
  %v37 = vld [vmem:[%s0 + $0x50] sm:$0xf]
  %v38 = vld [vmem:[%s0 + $0x54] sm:$0xf]
  %v39 = vld [vmem:[%s0 + $0x58] sm:$0xf]
  %v40 = vld [vmem:[%s0 + $0x5c] sm:$0xf]
  %v41 = vld [vmem:[%s0 + $0x60] sm:$0xf]
  %v42 = vld [vmem:[%s0 + $0x64] sm:$0xf]
  %v43 = vld [vmem:[%s0 + $0x68] sm:$0xf]
  %v44 = vld [vmem:[%s0 + $0x6c] sm:$0xf]
  %v45 = vld [vmem:[%s0 + $0x70] sm:$0xf]
  %v46 = vld [vmem:[%s0 + $0x74] sm:$0xf]
  %v47 = vld [vmem:[%s0 + $0x78] sm:$0xf]
  %v48 = vld [vmem:[%s0 + $0x7c] sm:$0xf]
  %v49 = vld [vmem:[%s2] sm:$0xff]
  %v50 = vld [vmem:[%s2 + $0x8] sm:$0xff]
  %52 = vset.pattern.permute.xlu0 0
  %53 = vperm.xlu0 %52, %v49
  %v54 = vpop.permute.xlu0 %53
  %57 = vset.pattern.permute.xlu0 0
  %58 = vperm.xlu0 %57, %v50
  %v59 = vpop.permute.xlu0 %58
  %v63 = vunpack.c.l.b16 %v15
  %v64 = vunpack.c.h.b16 %v15
  %v65 = vunpack.c.l.b16 %v16
  %v66 = vunpack.c.h.b16 %v16
  %v67 = vpack.c.b16 %v65, %v63
  %v68 = vpack.c.b16 %v66, %v64
  %v103 = vunpack.c.l.b16 %v17
  %v104 = vunpack.c.l.b16 %v18
  %v105 = vunpack.c.l.b16 %v19
  %v106 = vunpack.c.l.b16 %v20
  %v107 = vunpack.c.l.b16 %v21
  %v108 = vunpack.c.l.b16 %v22
  %v109 = vunpack.c.l.b16 %v23
  %v110 = vunpack.c.l.b16 %v24
  %v111 = vunpack.c.l.b16 %v25
  %v112 = vunpack.c.l.b16 %v26
  %v113 = vunpack.c.l.b16 %v27
  %v114 = vunpack.c.l.b16 %v28
  %v115 = vunpack.c.l.b16 %v29
  %v116 = vunpack.c.l.b16 %v30
  %v117 = vunpack.c.l.b16 %v31
  %v118 = vunpack.c.l.b16 %v32
  %v119 = vunpack.c.l.b16 %v33
  %v120 = vunpack.c.l.b16 %v34
  %v121 = vunpack.c.l.b16 %v35
  %v122 = vunpack.c.l.b16 %v36
  %v123 = vunpack.c.l.b16 %v37
  %v124 = vunpack.c.l.b16 %v38
  %v125 = vunpack.c.l.b16 %v39
  %v126 = vunpack.c.l.b16 %v40
  %v127 = vunpack.c.l.b16 %v41
  %v128 = vunpack.c.l.b16 %v42
  %v129 = vunpack.c.l.b16 %v43
  %v130 = vunpack.c.l.b16 %v44
  %v131 = vunpack.c.l.b16 %v45
  %v132 = vunpack.c.l.b16 %v46
  %v133 = vunpack.c.l.b16 %v47
  %v134 = vunpack.c.l.b16 %v48
  %v135 = vpack.c.b16 %v104, %v103
  %v136 = vpack.c.b16 %v106, %v105
  %v137 = vpack.c.b16 %v108, %v107
  %v138 = vpack.c.b16 %v110, %v109
  %v139 = vpack.c.b16 %v112, %v111
  %v140 = vpack.c.b16 %v114, %v113
  %v141 = vpack.c.b16 %v116, %v115
  %v142 = vpack.c.b16 %v118, %v117
  %v143 = vpack.c.b16 %v120, %v119
  %v144 = vpack.c.b16 %v122, %v121
  %v145 = vpack.c.b16 %v124, %v123
  %v146 = vpack.c.b16 %v126, %v125
  %v147 = vpack.c.b16 %v128, %v127
  %v148 = vpack.c.b16 %v130, %v129
  %v149 = vpack.c.b16 %v132, %v131
  %v150 = vpack.c.b16 %v134, %v133
  %167 = vmatprep.subr.bf16.mxu0 0
  %168 = vmatpush1.bf16.msra.mxu0 %v142
  %169 = vmatprep.subr.bf16.mxu0 0
  %170 = vmatpush1.bf16.msra.mxu0 %v141
  %171 = vmatprep.subr.bf16.mxu0 0
  %172 = vmatpush1.bf16.msra.mxu0 %v140
  %173 = vmatprep.subr.bf16.mxu0 0
  %174 = vmatpush1.bf16.msra.mxu0 %v139
  %175 = vmatprep.subr.bf16.mxu0 0
  %176 = vmatpush1.bf16.msra.mxu0 %v138
  %177 = vmatprep.subr.bf16.mxu0 0
  %178 = vmatpush1.bf16.msra.mxu0 %v137
  %179 = vmatprep.subr.bf16.mxu0 0
  %180 = vmatpush1.bf16.msra.mxu0 %v136
  %181 = vmatprep.subr.bf16.mxu0 0
  %182 = vmatpush1.bf16.msra.mxu0 %v135
  %183 = vmatprep.subr.bf16.mxu0 0
  %184 = vmatpush2.bf16.msra.mxu0 %v150
  %185 = vmatprep.subr.bf16.mxu0 0
  %186 = vmatpush2.bf16.msra.mxu0 %v149
  %187 = vmatprep.subr.bf16.mxu0 0
  %188 = vmatpush2.bf16.msra.mxu0 %v148
  %189 = vmatprep.subr.bf16.mxu0 0
  %190 = vmatpush2.bf16.msra.mxu0 %v147
  %191 = vmatprep.subr.bf16.mxu0 0
  %192 = vmatpush2.bf16.msra.mxu0 %v146
  %193 = vmatprep.subr.bf16.mxu0 0
  %194 = vmatpush2.bf16.msra.mxu0 %v145
  %195 = vmatprep.subr.bf16.mxu0 0
  %196 = vmatpush2.bf16.msra.mxu0 %v144
  %197 = vmatprep.subr.bf16.mxu0 0
  %198 = vmatpush2.bf16.msra.mxu0 %v143
  %199 = vmatprep.mubr.bf16.mxu0 %v68
  %200 = vmatmul.mubr.bf16.gmra.mxu0 %v67
  %v201 = vpop.f32.mrf.mxu0
  %v202 = vadd.f32 %v54, %v201
  %v203 = vpop.f32.mrf.mxu0
  %v204 = vpop.f32.mrf.mxu0
  %v205 = vadd.f32 %v59, %v204
  %v206 = vpop.f32.mrf.mxu0
  %207 = vdwg.mxu0
  %vm208 = vcmask 15360
  %209 = vst.msk [vmem:[%s3] sm:$0xff] %vm208, %v202
  %210 = vst.msk [vmem:[%s3 + $0x8] sm:$0xff] %vm208, %v205
  // Predicated region
  $region14: #{_lambda_.9} parent=0 // pred_check
    _
  $region15: #{_lambda_.9} parent=0 // pred_check_branch
    %212 = sbr.rel (0) target = $region17
  $region16: #{_lambda_.9} parent=0 // pred_region
    _
  $region17: #{_lambda_.9} parent=0 // pred_fallthru
    _
  // Predicated region
  $region18: #{_lambda_.9} parent=0 // pred_check
    _
  $region19: #{_lambda_.9} parent=0 // pred_check_branch
    %214 = sbr.rel (0) target = $region21
  $region20: #{_lambda_.9} parent=0 // pred_region
    _
  $region21: #{_lambda_.9} parent=0 // pred_fallthru
    _

</llo_original>
